<compile_context>
chip_gen: v6e
topology: v6e:2x2x1
jax: 0.10.0
libtpu: 0.0.40
codegen_flags: <defaults>
</compile_context>

<pallas_src>
import functools
import math

import jax
import jax.numpy as jnp
from jax.experimental import pallas as pl
from jax.experimental.pallas import tpu as pltpu


def _conv_tail_pool_kernel(xcol_ref, pool_ref, wflat_ref, bconv_ref,
                           w1_ref, b1_ref, bn_scale_ref, bn_shift_ref,
                           w2_ref, b2_ref, o_ref):
    # Fused Conv1d: one [E, K*E] x [K*E, B_TILE*Lout] MXU matmul, f32 accumulate.
    conv = jnp.dot(wflat_ref[...], xcol_ref[...],
                   preferred_element_type=jnp.float32)          # [E, B_TILE*Lout]
    conv = jnp.maximum(conv + bconv_ref[...], 0.0)              # bias + ReLU (conv_dropout = id)

    # Mean-pool over time as an MXU matmul against a block-diagonal 1/Lout matrix.
    pooled = jnp.dot(conv, pool_ref[...],
                     preferred_element_type=jnp.float32)        # [E, B_TILE]

    # Linear(E,32) -> Dropout(id) -> ReLU -> BatchNorm1d(eval, folded scale/shift)
    h = jnp.dot(w1_ref[...], pooled,
                preferred_element_type=jnp.float32) + b1_ref[...]   # [hid, B_TILE]
    h = jnp.maximum(h, 0.0)
    h = h * bn_scale_ref[...] + bn_shift_ref[...]

    # Output Linear(32, out_dim); store transposed => lane-dense [out_dim, B_TILE] slab.
    o_ref[...] = jnp.dot(w2_ref[...], h,
                         preferred_element_type=jnp.float32) + b2_ref[...]


@functools.partial(jax.jit, static_argnames=("kernel_size", "b_tile", "conv_dtype"))
def conv_tail_pool_forward(x, lengths, params, *, kernel_size=7, b_tile=128,
                           conv_dtype=jnp.bfloat16):
    """x: [B, E, L] float32 (PyTorch NCL layout). Returns [B, output_dim] logits.

    `lengths` is unused by the compute, matching the reference module (it only
    prints it); mean-pooling always divides by the full Lout.
    """
    del lengths  # host-side debug print in the PyTorch module; no compute effect
    B, E, L = x.shape
    K = kernel_size
    lout = L - K + 1
    hid = params["w1"].shape[0]
    out_dim = params["w2"].shape[0]

    # Pad batch up to a multiple of the batch tile (padded rows are sliced off).
    b_pad = -(-B // b_tile) * b_tile
    xp = x if b_pad == B else jnp.pad(x, ((0, b_pad - B), (0, 0), (0, 0)))

    # Wrapper-side im2col (layout plumbing, done once in XLA):
    #   x_col[k*E + e, b*Lout + t] = x[b, e, t + k]
    windows = jnp.stack([xp[:, :, k:k + lout] for k in range(K)], axis=1)  # [b_pad, K, E, lout]
    x_col = windows.transpose(1, 2, 0, 3).reshape(K * E, b_pad * lout).astype(conv_dtype)

    # Flattened conv weight: wflat[e_out, k*E + e_in] = wconv[k, e_out, e_in]
    wflat = params["wconv"].transpose(1, 0, 2).reshape(E, K * E).astype(conv_dtype)

    # Block-diagonal mean-pool matrix for one batch tile: [b_tile*lout, b_tile]
    rows = jnp.arange(b_tile * lout) // lout
    pool = (rows[:, None] == jnp.arange(b_tile)[None, :]).astype(jnp.float32) / lout

    grid = (b_pad // b_tile,)
    out_t = pl.pallas_call(
        _conv_tail_pool_kernel,
        out_shape=jax.ShapeDtypeStruct((out_dim, b_pad), jnp.float32),
        grid_spec=pltpu.PrefetchScalarGridSpec(
            num_scalar_prefetch=0,
            grid=grid,
            in_specs=[
                pl.BlockSpec((K * E, b_tile * lout), lambda i: (0, i)),   # x_col (im2col)
                pl.BlockSpec((b_tile * lout, b_tile), lambda i: (0, 0)),  # mean-pool matrix
                pl.BlockSpec((E, K * E), lambda i: (0, 0)),               # fused conv weight
                pl.BlockSpec((E, 1), lambda i: (0, 0)),                   # conv bias
                pl.BlockSpec((hid, E), lambda i: (0, 0)),                 # linear1 weight [hid, E]
                pl.BlockSpec((hid, 1), lambda i: (0, 0)),                 # linear1 bias
                pl.BlockSpec((hid, 1), lambda i: (0, 0)),                 # BN scale (folded)
                pl.BlockSpec((hid, 1), lambda i: (0, 0)),                 # BN shift (folded)
                pl.BlockSpec((out_dim, hid), lambda i: (0, 0)),           # output weight [out, hid]
                pl.BlockSpec((out_dim, 1), lambda i: (0, 0)),             # output bias
            ],
            out_specs=pl.BlockSpec((out_dim, b_tile), lambda i: (0, i)),  # lane-dense output slab
        ),
        compiler_params=pltpu.CompilerParams(
            dimension_semantics=("parallel",)),
    )(x_col, pool, wflat, params["bconv"], params["w1"], params["b1"],
      params["bn_scale"], params["bn_shift"], params["w2"], params["b2"])

    # Wrapper-side transpose back to [B, out_dim]; drop batch padding.
    return out_t.T[:B]


def _reference_forward(x, params, kernel_size, conv_dtype=jnp.bfloat16):
    """Pure-JAX reference (same bf16 conv-operand cast as the kernel)."""
    B, E, L = x.shape
    K = kernel_size
    lout = L - K + 1
    o = jnp.zeros((B, E, lout), jnp.float32)
    for k in range(K):
        o = o + jnp.einsum("oi,bil->bol",
                           params["wconv"][k].astype(conv_dtype),
                           x[:, :, k:k + lout].astype(conv_dtype),
                           preferred_element_type=jnp.float32)
    o = o + params["bconv"][None, :, :]
    o = jnp.maximum(o, 0.0)
    pooled = jnp.mean(o, axis=-1)                                  # [B, E]
    h = pooled @ params["w1"].T + params["b1"][:, 0]
    h = jnp.maximum(h, 0.0)
    h = h * params["bn_scale"][:, 0] + params["bn_shift"][:, 0]
    return h @ params["w2"].T + params["b2"][:, 0]


def init_params(key, embeddings_dim, hidden, output_dim, kernel_size):
    ks = jax.random.split(key, 8)
    E, H, O, K = embeddings_dim, hidden, output_dim, kernel_size
    s_conv = 1.0 / math.sqrt(E * K)
    s_l1 = 1.0 / math.sqrt(E)
    s_l2 = 1.0 / math.sqrt(H)
    # Conv1d weight in PyTorch is [E_out, E_in, K]; stored here as [K, E_out, E_in].
    wconv = jax.random.uniform(ks[0], (K, E, E), jnp.float32, -s_conv, s_conv)
    bconv = jax.random.uniform(ks[1], (E, 1), jnp.float32, -s_conv, s_conv)
    # Linear weights kept in PyTorch layout [out_features, in_features]; biases as columns.
    w1 = jax.random.uniform(ks[2], (H, E), jnp.float32, -s_l1, s_l1)
    b1 = jax.random.uniform(ks[3], (H, 1), jnp.float32, -s_l1, s_l1)
    # BatchNorm1d(32) eval mode: y = gamma*(x-rm)/sqrt(rv+eps)+beta, folded to scale/shift.
    gamma = jax.random.uniform(ks[4], (H, 1), jnp.float32, 0.5, 1.5)
    beta = jax.random.uniform(ks[5], (H, 1), jnp.float32, -0.5, 0.5)
    running_mean = jnp.zeros((H, 1), jnp.float32)
    running_var = jnp.ones((H, 1), jnp.float32)
    eps = 1e-5
    bn_scale = gamma / jnp.sqrt(running_var + eps)
    bn_shift = beta - running_mean * bn_scale
    w2 = jax.random.uniform(ks[6], (O, H), jnp.float32, -s_l2, s_l2)
    b2 = jax.random.uniform(ks[7], (O, 1), jnp.float32, -s_l2, s_l2)
    return dict(wconv=wconv, bconv=bconv, w1=w1, b1=b1,
                bn_scale=bn_scale, bn_shift=bn_shift, w2=w2, b2=b2)


if __name__ == "__main__":
    B, E, L = 2, 32, 16           # batch, embeddings_dim, sequence_length
    K = 7                         # kernel_size
    HID = 32                      # hidden width of the Linear block
    OUT = 12                      # output_dim

    key = jax.random.PRNGKey(0)
    k_x, k_p = jax.random.split(key)
    x = jax.random.normal(k_x, (B, E, L), jnp.float32)
    lengths = jnp.full((B,), L, jnp.int32)      # unused by the compute
    params = init_params(k_p, E, HID, OUT, K)

    logits = conv_tail_pool_forward(x, lengths, params, kernel_size=K)
    logits = jax.block_until_ready(logits)

    ref = _reference_forward(x, params, K)
    assert logits.shape == (B, OUT)
    assert jnp.allclose(logits, ref, atol=1e-2, rtol=1e-2), "mismatch vs reference"
    print("KERNEL_OK")
</pallas_src>

<mosaic_0001>
module attributes {stable_mosaic.version = 11 : i64} {
  func.func @_conv_tail_pool_kernel(%arg0: i32, %arg1: memref<224x1280xbf16, #tpu.memory_space<vmem>>, %arg2: memref<1280x128xf32, #tpu.memory_space<vmem>>, %arg3: memref<32x224xbf16, #tpu.memory_space<vmem>>, %arg4: memref<32x1xf32, #tpu.memory_space<vmem>>, %arg5: memref<32x32xf32, #tpu.memory_space<vmem>>, %arg6: memref<32x1xf32, #tpu.memory_space<vmem>>, %arg7: memref<32x1xf32, #tpu.memory_space<vmem>>, %arg8: memref<32x1xf32, #tpu.memory_space<vmem>>, %arg9: memref<12x32xf32, #tpu.memory_space<vmem>>, %arg10: memref<12x1xf32, #tpu.memory_space<vmem>>, %arg11: memref<12x128xf32, #tpu.memory_space<vmem>>) attributes {dimension_semantics = [#tpu.dimension_semantics<parallel>], iteration_bounds = array<i64: 1>, scalar_prefetch = 0 : i64, scratch_operands = 0 : i64, tpu.core_type = #tpu.core_type<tc>, window_params = [{transform_indices = @transform_0, window_bounds = array<i64: 224, 1280>}, {pipeline_mode = #tpu.pipeline_mode<synchronous>, transform_indices = @transform_1, window_bounds = array<i64: 1280, 128>}, {pipeline_mode = #tpu.pipeline_mode<synchronous>, transform_indices = @transform_2, window_bounds = array<i64: 32, 224>}, {pipeline_mode = #tpu.pipeline_mode<synchronous>, transform_indices = @transform_3, window_bounds = array<i64: 32, 1>}, {pipeline_mode = #tpu.pipeline_mode<synchronous>, transform_indices = @transform_4, window_bounds = array<i64: 32, 32>}, {pipeline_mode = #tpu.pipeline_mode<synchronous>, transform_indices = @transform_5, window_bounds = array<i64: 32, 1>}, {pipeline_mode = #tpu.pipeline_mode<synchronous>, transform_indices = @transform_6, window_bounds = array<i64: 32, 1>}, {pipeline_mode = #tpu.pipeline_mode<synchronous>, transform_indices = @transform_7, window_bounds = array<i64: 32, 1>}, {pipeline_mode = #tpu.pipeline_mode<synchronous>, transform_indices = @transform_8, window_bounds = array<i64: 12, 32>}, {pipeline_mode = #tpu.pipeline_mode<synchronous>, transform_indices = @transform_9, window_bounds = array<i64: 12, 1>}, {transform_indices = @transform_10, window_bounds = array<i64: 12, 128>}]} {
    %c0 = arith.constant 0 : index
    %c0_0 = arith.constant 0 : index
    %0 = vector.load %arg3[%c0, %c0_0] : memref<32x224xbf16, #tpu.memory_space<vmem>>, vector<32x224xbf16>
    %c0_1 = arith.constant 0 : index
    %c0_2 = arith.constant 0 : index
    %1 = vector.load %arg1[%c0_1, %c0_2] : memref<224x1280xbf16, #tpu.memory_space<vmem>>, vector<224x1280xbf16>
    %cst = arith.constant dense<0.000000e+00> : vector<32x1280xf32>
    %2 = tpu.matmul %0, %1, %cst {dimension_numbers = #tpu.dot_dimension_numbers<[1], [0], [0], [1], [0, 0, 1, 1], [], []>} : vector<32x224xbf16>, vector<224x1280xbf16>, vector<32x1280xf32> -> vector<32x1280xf32>
    %c0_3 = arith.constant 0 : index
    %c0_4 = arith.constant 0 : index
    %3 = vector.load %arg4[%c0_3, %c0_4] : memref<32x1xf32, #tpu.memory_space<vmem>>, vector<32x1xf32>
    %4 = vector.broadcast %3 : vector<32x1xf32> to vector<32x1280xf32>
    %5 = arith.addf %2, %4 : vector<32x1280xf32>
    %cst_5 = arith.constant 0.000000e+00 : f32
    %6 = vector.broadcast %cst_5 : f32 to vector<32x1280xf32>
    %7 = arith.maximumf %5, %6 : vector<32x1280xf32>
    %c0_6 = arith.constant 0 : index
    %c0_7 = arith.constant 0 : index
    %8 = vector.load %arg2[%c0_6, %c0_7] : memref<1280x128xf32, #tpu.memory_space<vmem>>, vector<1280x128xf32>
    %cst_8 = arith.constant dense<0.000000e+00> : vector<32x128xf32>
    %9 = tpu.matmul %7, %8, %cst_8 {dimension_numbers = #tpu.dot_dimension_numbers<[1], [0], [0], [1], [0, 0, 1, 1], [], []>} : vector<32x1280xf32>, vector<1280x128xf32>, vector<32x128xf32> -> vector<32x128xf32>
    %c0_9 = arith.constant 0 : index
    %c0_10 = arith.constant 0 : index
    %10 = vector.load %arg5[%c0_9, %c0_10] : memref<32x32xf32, #tpu.memory_space<vmem>>, vector<32x32xf32>
    %cst_11 = arith.constant dense<0.000000e+00> : vector<32x128xf32>
    %11 = tpu.matmul %10, %9, %cst_11 {dimension_numbers = #tpu.dot_dimension_numbers<[1], [0], [0], [1], [0, 0, 1, 1], [], []>} : vector<32x32xf32>, vector<32x128xf32>, vector<32x128xf32> -> vector<32x128xf32>
    %c0_12 = arith.constant 0 : index
    %c0_13 = arith.constant 0 : index
    %12 = vector.load %arg6[%c0_12, %c0_13] : memref<32x1xf32, #tpu.memory_space<vmem>>, vector<32x1xf32>
    %13 = vector.broadcast %12 : vector<32x1xf32> to vector<32x128xf32>
    %14 = arith.addf %11, %13 : vector<32x128xf32>
    %cst_14 = arith.constant 0.000000e+00 : f32
    %15 = vector.broadcast %cst_14 : f32 to vector<32x128xf32>
    %16 = arith.maximumf %14, %15 : vector<32x128xf32>
    %c0_15 = arith.constant 0 : index
    %c0_16 = arith.constant 0 : index
    %17 = vector.load %arg7[%c0_15, %c0_16] : memref<32x1xf32, #tpu.memory_space<vmem>>, vector<32x1xf32>
    %18 = vector.broadcast %17 : vector<32x1xf32> to vector<32x128xf32>
    %19 = arith.mulf %16, %18 : vector<32x128xf32>
    %c0_17 = arith.constant 0 : index
    %c0_18 = arith.constant 0 : index
    %20 = vector.load %arg8[%c0_17, %c0_18] : memref<32x1xf32, #tpu.memory_space<vmem>>, vector<32x1xf32>
    %21 = vector.broadcast %20 : vector<32x1xf32> to vector<32x128xf32>
    %22 = arith.addf %19, %21 : vector<32x128xf32>
    %c0_19 = arith.constant 0 : index
    %c0_20 = arith.constant 0 : index
    %23 = vector.load %arg9[%c0_19, %c0_20] : memref<12x32xf32, #tpu.memory_space<vmem>>, vector<12x32xf32>
    %cst_21 = arith.constant dense<0.000000e+00> : vector<12x128xf32>
    %24 = tpu.matmul %23, %22, %cst_21 {dimension_numbers = #tpu.dot_dimension_numbers<[1], [0], [0], [1], [0, 0, 1, 1], [], []>} : vector<12x32xf32>, vector<32x128xf32>, vector<12x128xf32> -> vector<12x128xf32>
    %c0_22 = arith.constant 0 : index
    %c0_23 = arith.constant 0 : index
    %25 = vector.load %arg10[%c0_22, %c0_23] : memref<12x1xf32, #tpu.memory_space<vmem>>, vector<12x1xf32>
    %26 = vector.broadcast %25 : vector<12x1xf32> to vector<12x128xf32>
    %27 = arith.addf %24, %26 : vector<12x128xf32>
    %c0_24 = arith.constant 0 : index
    %c0_25 = arith.constant 0 : index
    %28 = vector.load %arg11[%c0_24, %c0_25] : memref<12x128xf32, #tpu.memory_space<vmem>>, vector<12x128xf32>
    tpu.vector_store %arg11[%c0_24, %c0_25], %27 {strides = array<i32>} : memref<12x128xf32, #tpu.memory_space<vmem>>, vector<12x128xf32>,
    return
  }
  func.func @transform_0(%arg0: i32) -> (i32, i32) {
    %c0_i32 = arith.constant 0 : i32
    %c0_i32_0 = arith.constant 0 : i32
    return %c0_i32, %arg0 : i32, i32
  }
  func.func @transform_1(%arg0: i32) -> (i32, i32) {
    %c0_i32 = arith.constant 0 : i32
    %c0_i32_0 = arith.constant 0 : i32
    %c0_i32_1 = arith.constant 0 : i32
    return %c0_i32, %c0_i32_0 : i32, i32
  }
  func.func @transform_2(%arg0: i32) -> (i32, i32) {
    %c0_i32 = arith.constant 0 : i32
    %c0_i32_0 = arith.constant 0 : i32
    %c0_i32_1 = arith.constant 0 : i32
    return %c0_i32, %c0_i32_0 : i32, i32
  }
  func.func @transform_3(%arg0: i32) -> (i32, i32) {
    %c0_i32 = arith.constant 0 : i32
    %c0_i32_0 = arith.constant 0 : i32
    %c0_i32_1 = arith.constant 0 : i32
    return %c0_i32, %c0_i32_0 : i32, i32
  }
  func.func @transform_4(%arg0: i32) -> (i32, i32) {
    %c0_i32 = arith.constant 0 : i32
    %c0_i32_0 = arith.constant 0 : i32
    %c0_i32_1 = arith.constant 0 : i32
    return %c0_i32, %c0_i32_0 : i32, i32
  }
  func.func @transform_5(%arg0: i32) -> (i32, i32) {
    %c0_i32 = arith.constant 0 : i32
    %c0_i32_0 = arith.constant 0 : i32
    %c0_i32_1 = arith.constant 0 : i32
    return %c0_i32, %c0_i32_0 : i32, i32
  }
  func.func @transform_6(%arg0: i32) -> (i32, i32) {
    %c0_i32 = arith.constant 0 : i32
    %c0_i32_0 = arith.constant 0 : i32
    %c0_i32_1 = arith.constant 0 : i32
    return %c0_i32, %c0_i32_0 : i32, i32
  }
  func.func @transform_7(%arg0: i32) -> (i32, i32) {
    %c0_i32 = arith.constant 0 : i32
    %c0_i32_0 = arith.constant 0 : i32
    %c0_i32_1 = arith.constant 0 : i32
    return %c0_i32, %c0_i32_0 : i32, i32
  }
  func.func @transform_8(%arg0: i32) -> (i32, i32) {
    %c0_i32 = arith.constant 0 : i32
    %c0_i32_0 = arith.constant 0 : i32
    %c0_i32_1 = arith.constant 0 : i32
    return %c0_i32, %c0_i32_0 : i32, i32
  }
  func.func @transform_9(%arg0: i32) -> (i32, i32) {
    %c0_i32 = arith.constant 0 : i32
    %c0_i32_0 = arith.constant 0 : i32
    %c0_i32_1 = arith.constant 0 : i32
    return %c0_i32, %c0_i32_0 : i32, i32
  }
  func.func @transform_10(%arg0: i32) -> (i32, i32) {
    %c0_i32 = arith.constant 0 : i32
    %c0_i32_0 = arith.constant 0 : i32
    return %c0_i32, %arg0 : i32, i32
  }
}

</mosaic_0001>

<llo_original>
// kernel: conv_tail_pool_forward.1
$region0: #{conv_tail_pool_forward.1}
  #allocation0 [shape = 'u32[]', space=smem, size = 0x4, offset = 0x4, fixed_abs, tag = 'smem constant byte address 0x4 - core index']
  #allocation1 [shape = 'u32[144,128]{1,0:T(1,128)}', space=vmem, size = 0x12000, scoped, tag = 'internal scratch']
  %s0 = inlined_call_operand.vmem [shape: bf16[224,1280], index: 0, kind: input, shape index: {}]
  %s1 = inlined_call_operand.vmem [shape: f32[1280,128], index: 1, kind: input, shape index: {}]
  %s2 = inlined_call_operand.vmem [shape: bf16[32,224], index: 2, kind: input, shape index: {}]
  %s3 = inlined_call_operand.vmem [shape: f32[32,1], index: 3, kind: input, shape index: {}]
  %s4 = inlined_call_operand.vmem [shape: f32[32,32], index: 4, kind: input, shape index: {}]
  %s5 = inlined_call_operand.vmem [shape: f32[32,1], index: 5, kind: input, shape index: {}]
  %s6 = inlined_call_operand.vmem [shape: f32[32,1], index: 6, kind: input, shape index: {}]
  %s7 = inlined_call_operand.vmem [shape: f32[32,1], index: 7, kind: input, shape index: {}]
  %s8 = inlined_call_operand.vmem [shape: f32[12,32], index: 8, kind: input, shape index: {}]
  %s9 = inlined_call_operand.vmem [shape: f32[12,1], index: 9, kind: input, shape index: {}]
  %s10 = inlined_call_operand.vmem [shape: f32[12,128], index: 10, kind: output, shape index: {}]
  %s11 = sld [smem:[#allocation0]]
  $region50: #{conv_tail_pool_forward.1} parent=0
    _
  %s13 = ssub.s32 1, %s11
  %s14 = scalar_select 0, %s13, %s11
  // Predicated region
  $region2: #{conv_tail_pool_forward.1} parent=0 // pred_check
    _
  $region3: #{conv_tail_pool_forward.1} parent=0 // pred_check_branch
    %16 = sbr.rel (0) target = $region5
  $region4: #{conv_tail_pool_forward.1} parent=0 // pred_region
    _
  $region5: #{conv_tail_pool_forward.1} parent=0 // pred_fallthru
    _
  // Predicated region
  $region6: #{conv_tail_pool_forward.1} parent=0 // pred_check
    _
  $region7: #{conv_tail_pool_forward.1} parent=0 // pred_check_branch
    %18 = sbr.rel (0) target = $region9
  $region8: #{conv_tail_pool_forward.1} parent=0 // pred_region
    _
  $region9: #{conv_tail_pool_forward.1} parent=0 // pred_fallthru
    _
  // Predicated region
  $region10: #{conv_tail_pool_forward.1} parent=0 // pred_check
    _
  $region11: #{conv_tail_pool_forward.1} parent=0 // pred_check_branch
    %20 = sbr.rel (0) target = $region13
  $region12: #{conv_tail_pool_forward.1} parent=0 // pred_region
    _
  $region13: #{conv_tail_pool_forward.1} parent=0 // pred_fallthru
    _
  // Predicated region
  $region14: #{conv_tail_pool_forward.1} parent=0 // pred_check
    _
  $region15: #{conv_tail_pool_forward.1} parent=0 // pred_check_branch
    %22 = sbr.rel (0) target = $region17
  $region16: #{conv_tail_pool_forward.1} parent=0 // pred_region
    _
  $region17: #{conv_tail_pool_forward.1} parent=0 // pred_fallthru
    _
  // Predicated region
  $region18: #{conv_tail_pool_forward.1} parent=0 // pred_check
    _
  $region19: #{conv_tail_pool_forward.1} parent=0 // pred_check_branch
    %24 = sbr.rel (0) target = $region21
  $region20: #{conv_tail_pool_forward.1} parent=0 // pred_region
    _
  $region21: #{conv_tail_pool_forward.1} parent=0 // pred_fallthru
    _
  // Predicated region
  $region22: #{conv_tail_pool_forward.1} parent=0 // pred_check
    _
  $region23: #{conv_tail_pool_forward.1} parent=0 // pred_check_branch
    %26 = sbr.rel (0) target = $region25
  $region24: #{conv_tail_pool_forward.1} parent=0 // pred_region
    _
  $region25: #{conv_tail_pool_forward.1} parent=0 // pred_fallthru
    _
  // Predicated region
  $region26: #{conv_tail_pool_forward.1} parent=0 // pred_check
    _
  $region27: #{conv_tail_pool_forward.1} parent=0 // pred_check_branch
    %28 = sbr.rel (0) target = $region29
  $region28: #{conv_tail_pool_forward.1} parent=0 // pred_region
    _
  $region29: #{conv_tail_pool_forward.1} parent=0 // pred_fallthru
    _
  // Predicated region
  $region30: #{conv_tail_pool_forward.1} parent=0 // pred_check
    _
  $region31: #{conv_tail_pool_forward.1} parent=0 // pred_check_branch
    %30 = sbr.rel (0) target = $region33
  $region32: #{conv_tail_pool_forward.1} parent=0 // pred_region
    _
  $region33: #{conv_tail_pool_forward.1} parent=0 // pred_fallthru
    _
  // Predicated region
  $region34: #{conv_tail_pool_forward.1} parent=0 // pred_check
    _
  $region35: #{conv_tail_pool_forward.1} parent=0 // pred_check_branch
    %32 = sbr.rel (0) target = $region37
  $region36: #{conv_tail_pool_forward.1} parent=0 // pred_region
    _
  $region37: #{conv_tail_pool_forward.1} parent=0 // pred_fallthru
    _
  // Predicated region
  $region38: #{conv_tail_pool_forward.1} parent=0 // pred_check
    _
  $region39: #{conv_tail_pool_forward.1} parent=0 // pred_check_branch
    %34 = sbr.rel (0) target = $region41
  $region40: #{conv_tail_pool_forward.1} parent=0 // pred_region
    _
  $region41: #{conv_tail_pool_forward.1} parent=0 // pred_fallthru
    _
  %v36 = vld [vmem:[%s2] sm:$0xff]
  %v37 = vld [vmem:[%s2 + $0x8] sm:$0xff]
  %v38 = vld [vmem:[%s2 + $0x10] sm:$0xff]
  %v39 = vld [vmem:[%s2 + $0x18] sm:$0xff]
  %v40 = vld [vmem:[%s0] sm:$0xff]
  %v41 = vld [vmem:[%s0 + $0x8] sm:$0xff]
  %v42 = vld [vmem:[%s0 + $0x10] sm:$0xff]
  %v43 = vld [vmem:[%s0 + $0x18] sm:$0xff]
  %v44 = vld [vmem:[%s0 + $0x20] sm:$0xff]
  %v45 = vld [vmem:[%s0 + $0x28] sm:$0xff]
  %v46 = vld [vmem:[%s0 + $0x30] sm:$0xff]
  %v47 = vld [vmem:[%s0 + $0x38] sm:$0xff]
  %v48 = vld [vmem:[%s0 + $0x40] sm:$0xff]
  %v49 = vld [vmem:[%s0 + $0x48] sm:$0xff]
  %v50 = vld [vmem:[%s0 + $0x50] sm:$0xff]
  %v51 = vld [vmem:[%s0 + $0x58] sm:$0xff]
  %v52 = vld [vmem:[%s0 + $0x60] sm:$0xff]
  %v53 = vld [vmem:[%s0 + $0x68] sm:$0xff]
  %v54 = vld [vmem:[%s0 + $0x70] sm:$0xff]
  %v55 = vld [vmem:[%s0 + $0x78] sm:$0xff]
  %v56 = vld [vmem:[%s0 + $0x80] sm:$0xff]
  %v57 = vld [vmem:[%s0 + $0x88] sm:$0xff]
  %v58 = vld [vmem:[%s0 + $0x90] sm:$0xff]
  %v59 = vld [vmem:[%s0 + $0x98] sm:$0xff]
  %v60 = vld [vmem:[%s0 + $0xa0] sm:$0xff]
  %v61 = vld [vmem:[%s0 + $0xa8] sm:$0xff]
  %v62 = vld [vmem:[%s0 + $0xb0] sm:$0xff]
  %v63 = vld [vmem:[%s0 + $0xb8] sm:$0xff]
  %v64 = vld [vmem:[%s0 + $0xc0] sm:$0xff]
  %v65 = vld [vmem:[%s0 + $0xc8] sm:$0xff]
  %v66 = vld [vmem:[%s0 + $0xd0] sm:$0xff]
  %v67 = vld [vmem:[%s0 + $0xd8] sm:$0xff]
  %v68 = vld [vmem:[%s0 + $0xe0] sm:$0xff]
  %v69 = vld [vmem:[%s0 + $0xe8] sm:$0xff]
  %v70 = vld [vmem:[%s0 + $0xf0] sm:$0xff]
  %v71 = vld [vmem:[%s0 + $0xf8] sm:$0xff]
  %v72 = vld [vmem:[%s0 + $0x100] sm:$0xff]
  %v73 = vld [vmem:[%s0 + $0x108] sm:$0xff]
  %v74 = vld [vmem:[%s0 + $0x110] sm:$0xff]
  %v75 = vld [vmem:[%s0 + $0x118] sm:$0xff]
  %v76 = vld [vmem:[%s0 + $0x120] sm:$0xff]
  %v77 = vld [vmem:[%s0 + $0x128] sm:$0xff]
  %v78 = vld [vmem:[%s0 + $0x130] sm:$0xff]
  %v79 = vld [vmem:[%s0 + $0x138] sm:$0xff]
  %v80 = vld [vmem:[%s0 + $0x140] sm:$0xff]
  %v81 = vld [vmem:[%s0 + $0x148] sm:$0xff]
  %v82 = vld [vmem:[%s0 + $0x150] sm:$0xff]
  %v83 = vld [vmem:[%s0 + $0x158] sm:$0xff]
  %v84 = vld [vmem:[%s0 + $0x160] sm:$0xff]
  %v85 = vld [vmem:[%s0 + $0x168] sm:$0xff]
  %v86 = vld [vmem:[%s0 + $0x170] sm:$0xff]
  %v87 = vld [vmem:[%s0 + $0x178] sm:$0xff]
  %v88 = vld [vmem:[%s0 + $0x180] sm:$0xff]
  %v89 = vld [vmem:[%s0 + $0x188] sm:$0xff]
  %v90 = vld [vmem:[%s0 + $0x190] sm:$0xff]
  %v91 = vld [vmem:[%s0 + $0x198] sm:$0xff]
  %v92 = vld [vmem:[%s0 + $0x1a0] sm:$0xff]
  %v93 = vld [vmem:[%s0 + $0x1a8] sm:$0xff]
  %v94 = vld [vmem:[%s0 + $0x1b0] sm:$0xff]
  %v95 = vld [vmem:[%s0 + $0x1b8] sm:$0xff]
  %v96 = vld [vmem:[%s0 + $0x1c0] sm:$0xff]
  %v97 = vld [vmem:[%s0 + $0x1c8] sm:$0xff]
  %v98 = vld [vmem:[%s0 + $0x1d0] sm:$0xff]
  %v99 = vld [vmem:[%s0 + $0x1d8] sm:$0xff]
  %v100 = vld [vmem:[%s0 + $0x1e0] sm:$0xff]
  %v101 = vld [vmem:[%s0 + $0x1e8] sm:$0xff]
  %v102 = vld [vmem:[%s0 + $0x1f0] sm:$0xff]
  %v103 = vld [vmem:[%s0 + $0x1f8] sm:$0xff]
  %v104 = vld [vmem:[%s0 + $0x200] sm:$0xff]
  %v105 = vld [vmem:[%s0 + $0x208] sm:$0xff]
  %v106 = vld [vmem:[%s0 + $0x210] sm:$0xff]
  %v107 = vld [vmem:[%s0 + $0x218] sm:$0xff]
  %v108 = vld [vmem:[%s0 + $0x220] sm:$0xff]
  %v109 = vld [vmem:[%s0 + $0x228] sm:$0xff]
  %v110 = vld [vmem:[%s0 + $0x230] sm:$0xff]
  %v111 = vld [vmem:[%s0 + $0x238] sm:$0xff]
  %v112 = vld [vmem:[%s0 + $0x240] sm:$0xff]
  %v113 = vld [vmem:[%s0 + $0x248] sm:$0xff]
  %v114 = vld [vmem:[%s0 + $0x250] sm:$0xff]
  %v115 = vld [vmem:[%s0 + $0x258] sm:$0xff]
  %v116 = vld [vmem:[%s0 + $0x260] sm:$0xff]
  %v117 = vld [vmem:[%s0 + $0x268] sm:$0xff]
  %v118 = vld [vmem:[%s0 + $0x270] sm:$0xff]
  %v119 = vld [vmem:[%s0 + $0x278] sm:$0xff]
  %v120 = vld [vmem:[%s0 + $0x280] sm:$0xff]
  %v121 = vld [vmem:[%s0 + $0x288] sm:$0xff]
  %v122 = vld [vmem:[%s0 + $0x290] sm:$0xff]
  %v123 = vld [vmem:[%s0 + $0x298] sm:$0xff]
  %v124 = vld [vmem:[%s0 + $0x2a0] sm:$0xff]
  %v125 = vld [vmem:[%s0 + $0x2a8] sm:$0xff]
  %v126 = vld [vmem:[%s0 + $0x2b0] sm:$0xff]
  %v127 = vld [vmem:[%s0 + $0x2b8] sm:$0xff]
  %v128 = vld [vmem:[%s0 + $0x2c0] sm:$0xff]
  %v129 = vld [vmem:[%s0 + $0x2c8] sm:$0xff]
  %v130 = vld [vmem:[%s0 + $0x2d0] sm:$0xff]
  %v131 = vld [vmem:[%s0 + $0x2d8] sm:$0xff]
  %v132 = vld [vmem:[%s0 + $0x2e0] sm:$0xff]
  %v133 = vld [vmem:[%s0 + $0x2e8] sm:$0xff]
  %v134 = vld [vmem:[%s0 + $0x2f0] sm:$0xff]
  %v135 = vld [vmem:[%s0 + $0x2f8] sm:$0xff]
  %v136 = vld [vmem:[%s0 + $0x300] sm:$0xff]
  %v137 = vld [vmem:[%s0 + $0x308] sm:$0xff]
  %v138 = vld [vmem:[%s0 + $0x310] sm:$0xff]
  %v139 = vld [vmem:[%s0 + $0x318] sm:$0xff]
  %v140 = vld [vmem:[%s0 + $0x320] sm:$0xff]
  %v141 = vld [vmem:[%s0 + $0x328] sm:$0xff]
  %v142 = vld [vmem:[%s0 + $0x330] sm:$0xff]
  %v143 = vld [vmem:[%s0 + $0x338] sm:$0xff]
  %v144 = vld [vmem:[%s0 + $0x340] sm:$0xff]
  %v145 = vld [vmem:[%s0 + $0x348] sm:$0xff]
  %v146 = vld [vmem:[%s0 + $0x350] sm:$0xff]
  %v147 = vld [vmem:[%s0 + $0x358] sm:$0xff]
  %v148 = vld [vmem:[%s0 + $0x360] sm:$0xff]
  %v149 = vld [vmem:[%s0 + $0x368] sm:$0xff]
  %v150 = vld [vmem:[%s0 + $0x370] sm:$0xff]
  %v151 = vld [vmem:[%s0 + $0x378] sm:$0xff]
  %v152 = vld [vmem:[%s0 + $0x380] sm:$0xff]
  %v153 = vld [vmem:[%s0 + $0x388] sm:$0xff]
  %v154 = vld [vmem:[%s0 + $0x390] sm:$0xff]
  %v155 = vld [vmem:[%s0 + $0x398] sm:$0xff]
  %v156 = vld [vmem:[%s0 + $0x3a0] sm:$0xff]
  %v157 = vld [vmem:[%s0 + $0x3a8] sm:$0xff]
  %v158 = vld [vmem:[%s0 + $0x3b0] sm:$0xff]
  %v159 = vld [vmem:[%s0 + $0x3b8] sm:$0xff]
  %v160 = vld [vmem:[%s0 + $0x3c0] sm:$0xff]
  %v161 = vld [vmem:[%s0 + $0x3c8] sm:$0xff]
  %v162 = vld [vmem:[%s0 + $0x3d0] sm:$0xff]
  %v163 = vld [vmem:[%s0 + $0x3d8] sm:$0xff]
  %v164 = vld [vmem:[%s0 + $0x3e0] sm:$0xff]
  %v165 = vld [vmem:[%s0 + $0x3e8] sm:$0xff]
  %v166 = vld [vmem:[%s0 + $0x3f0] sm:$0xff]
  %v167 = vld [vmem:[%s0 + $0x3f8] sm:$0xff]
  %v168 = vld [vmem:[%s0 + $0x400] sm:$0xff]
  %v169 = vld [vmem:[%s0 + $0x408] sm:$0xff]
  %v170 = vld [vmem:[%s0 + $0x410] sm:$0xff]
  %v171 = vld [vmem:[%s0 + $0x418] sm:$0xff]
  %v172 = vld [vmem:[%s0 + $0x420] sm:$0xff]
  %v173 = vld [vmem:[%s0 + $0x428] sm:$0xff]
  %v174 = vld [vmem:[%s0 + $0x430] sm:$0xff]
  %v175 = vld [vmem:[%s0 + $0x438] sm:$0xff]
  %v176 = vld [vmem:[%s0 + $0x440] sm:$0xff]
  %v177 = vld [vmem:[%s0 + $0x448] sm:$0xff]
  %v178 = vld [vmem:[%s0 + $0x450] sm:$0xff]
  %v179 = vld [vmem:[%s0 + $0x458] sm:$0xff]
  %v180 = vld [vmem:[%s3] sm:$0xff]
  %v181 = vld [vmem:[%s3 + $0x8] sm:$0xff]
  %v182 = vld [vmem:[%s3 + $0x10] sm:$0xff]
  %v183 = vld [vmem:[%s3 + $0x18] sm:$0xff]
  %185 = vset.pattern.permute.xlu0 0
  %186 = vperm.xlu0 %185, %v180
  %v187 = vpop.permute.xlu0 %186
  %190 = vset.pattern.permute.xlu0 0
  %191 = vperm.xlu0 %190, %v181
  %v192 = vpop.permute.xlu0 %191
  %195 = vset.pattern.permute.xlu0 0
  %196 = vperm.xlu0 %195, %v182
  %v197 = vpop.permute.xlu0 %196
  %200 = vset.pattern.permute.xlu0 0
  %201 = vperm.xlu0 %200, %v183
  %v202 = vpop.permute.xlu0 %201
  %v208 = vunpack.c.l.b16 %v36
  %v209 = vunpack.c.h.b16 %v36
  %v210 = vunpack.c.l.b16 %v37
  %v211 = vunpack.c.h.b16 %v37
  %v212 = vunpack.c.l.b16 %v38
  %v213 = vunpack.c.h.b16 %v38
  %v214 = vunpack.c.l.b16 %v39
  %v215 = vunpack.c.h.b16 %v39
  %v216 = vpack.c.b16 %v210, %v208
  %v217 = vpack.c.b16 %v211, %v209
  %v218 = vpack.c.b16 %v214, %v212
  %v219 = vpack.c.b16 %v215, %v213
  %v362 = vunpack.c.l.b16 %v40
  %v363 = vunpack.c.h.b16 %v40
  %v364 = vunpack.c.l.b16 %v41
  %v365 = vunpack.c.h.b16 %v41
  %v366 = vunpack.c.l.b16 %v42
  %v367 = vunpack.c.h.b16 %v42
  %v368 = vunpack.c.l.b16 %v43
  %v369 = vunpack.c.h.b16 %v43
  %v370 = vunpack.c.l.b16 %v44
  %v371 = vunpack.c.h.b16 %v44
  %v372 = vunpack.c.l.b16 %v45
  %v373 = vunpack.c.h.b16 %v45
  %v374 = vunpack.c.l.b16 %v46
  %v375 = vunpack.c.h.b16 %v46
  %v376 = vunpack.c.l.b16 %v47
  %v377 = vunpack.c.h.b16 %v47
  %v378 = vunpack.c.l.b16 %v48
  %v379 = vunpack.c.h.b16 %v48
  %v380 = vunpack.c.l.b16 %v49
  %v381 = vunpack.c.h.b16 %v49
  %v382 = vunpack.c.l.b16 %v50
  %v383 = vunpack.c.h.b16 %v50
  %v384 = vunpack.c.l.b16 %v51
  %v385 = vunpack.c.h.b16 %v51
  %v386 = vunpack.c.l.b16 %v52
  %v387 = vunpack.c.h.b16 %v52
  %v388 = vunpack.c.l.b16 %v53
  %v389 = vunpack.c.h.b16 %v53
  %v390 = vunpack.c.l.b16 %v54
  %v391 = vunpack.c.h.b16 %v54
  %v392 = vunpack.c.l.b16 %v55
  %v393 = vunpack.c.h.b16 %v55
  %v394 = vunpack.c.l.b16 %v56
  %v395 = vunpack.c.h.b16 %v56
  %v396 = vunpack.c.l.b16 %v57
  %v397 = vunpack.c.h.b16 %v57
  %v398 = vunpack.c.l.b16 %v58
  %v399 = vunpack.c.h.b16 %v58
  %v400 = vunpack.c.l.b16 %v59
  %v401 = vunpack.c.h.b16 %v59
  %v402 = vunpack.c.l.b16 %v60
  %v403 = vunpack.c.h.b16 %v60
  %v404 = vunpack.c.l.b16 %v61
  %v405 = vunpack.c.h.b16 %v61
  %v406 = vunpack.c.l.b16 %v62
  %v407 = vunpack.c.h.b16 %v62
  %v408 = vunpack.c.l.b16 %v63
  %v409 = vunpack.c.h.b16 %v63
  %v410 = vunpack.c.l.b16 %v64
  %v411 = vunpack.c.h.b16 %v64
  %v412 = vunpack.c.l.b16 %v65
  %v413 = vunpack.c.h.b16 %v65
  %v414 = vunpack.c.l.b16 %v66
  %v415 = vunpack.c.h.b16 %v66
  %v416 = vunpack.c.l.b16 %v67
  %v417 = vunpack.c.h.b16 %v67
  %v418 = vunpack.c.l.b16 %v68
  %v419 = vunpack.c.h.b16 %v68
  %v420 = vunpack.c.l.b16 %v69
  %v421 = vunpack.c.h.b16 %v69
  %v422 = vunpack.c.l.b16 %v70
  %v423 = vunpack.c.h.b16 %v70
  %v424 = vunpack.c.l.b16 %v71
  %v425 = vunpack.c.h.b16 %v71
  %v426 = vunpack.c.l.b16 %v72
  %v427 = vunpack.c.h.b16 %v72
  %v428 = vunpack.c.l.b16 %v73
  %v429 = vunpack.c.h.b16 %v73
  %v430 = vunpack.c.l.b16 %v74
  %v431 = vunpack.c.h.b16 %v74
  %v432 = vunpack.c.l.b16 %v75
  %v433 = vunpack.c.h.b16 %v75
  %v434 = vunpack.c.l.b16 %v76
  %v435 = vunpack.c.h.b16 %v76
  %v436 = vunpack.c.l.b16 %v77
  %v437 = vunpack.c.h.b16 %v77
  %v438 = vunpack.c.l.b16 %v78
  %v439 = vunpack.c.h.b16 %v78
  %v440 = vunpack.c.l.b16 %v79
  %v441 = vunpack.c.h.b16 %v79
  %v442 = vunpack.c.l.b16 %v80
  %v443 = vunpack.c.h.b16 %v80
  %v444 = vunpack.c.l.b16 %v81
  %v445 = vunpack.c.h.b16 %v81
  %v446 = vunpack.c.l.b16 %v82
  %v447 = vunpack.c.h.b16 %v82
  %v448 = vunpack.c.l.b16 %v83
  %v449 = vunpack.c.h.b16 %v83
  %v450 = vunpack.c.l.b16 %v84
  %v451 = vunpack.c.h.b16 %v84
  %v452 = vunpack.c.l.b16 %v85
  %v453 = vunpack.c.h.b16 %v85
  %v454 = vunpack.c.l.b16 %v86
  %v455 = vunpack.c.h.b16 %v86
  %v456 = vunpack.c.l.b16 %v87
  %v457 = vunpack.c.h.b16 %v87
  %v458 = vunpack.c.l.b16 %v88
  %v459 = vunpack.c.h.b16 %v88
  %v460 = vunpack.c.l.b16 %v89
  %v461 = vunpack.c.h.b16 %v89
  %v462 = vunpack.c.l.b16 %v90
  %v463 = vunpack.c.h.b16 %v90
  %v464 = vunpack.c.l.b16 %v91
  %v465 = vunpack.c.h.b16 %v91
  %v466 = vunpack.c.l.b16 %v92
  %v467 = vunpack.c.h.b16 %v92
  %v468 = vunpack.c.l.b16 %v93
  %v469 = vunpack.c.h.b16 %v93
  %v470 = vunpack.c.l.b16 %v94
  %v471 = vunpack.c.h.b16 %v94
  %v472 = vunpack.c.l.b16 %v95
  %v473 = vunpack.c.h.b16 %v95
  %v474 = vunpack.c.l.b16 %v96
  %v475 = vunpack.c.h.b16 %v96
  %v476 = vunpack.c.l.b16 %v97
  %v477 = vunpack.c.h.b16 %v97
  %v478 = vunpack.c.l.b16 %v98
  %v479 = vunpack.c.h.b16 %v98
  %v480 = vunpack.c.l.b16 %v99
  %v481 = vunpack.c.h.b16 %v99
  %v482 = vunpack.c.l.b16 %v100
  %v483 = vunpack.c.h.b16 %v100
  %v484 = vunpack.c.l.b16 %v101
  %v485 = vunpack.c.h.b16 %v101
  %v486 = vunpack.c.l.b16 %v102
  %v487 = vunpack.c.h.b16 %v102
  %v488 = vunpack.c.l.b16 %v103
  %v489 = vunpack.c.h.b16 %v103
  %v490 = vunpack.c.l.b16 %v104
  %v491 = vunpack.c.h.b16 %v104
  %v492 = vunpack.c.l.b16 %v105
  %v493 = vunpack.c.h.b16 %v105
  %v494 = vunpack.c.l.b16 %v106
  %v495 = vunpack.c.h.b16 %v106
  %v496 = vunpack.c.l.b16 %v107
  %v497 = vunpack.c.h.b16 %v107
  %v498 = vunpack.c.l.b16 %v108
  %v499 = vunpack.c.h.b16 %v108
  %v500 = vunpack.c.l.b16 %v109
  %v501 = vunpack.c.h.b16 %v109
  %v502 = vunpack.c.l.b16 %v110
  %v503 = vunpack.c.h.b16 %v110
  %v504 = vunpack.c.l.b16 %v111
  %v505 = vunpack.c.h.b16 %v111
  %v506 = vunpack.c.l.b16 %v112
  %v507 = vunpack.c.h.b16 %v112
  %v508 = vunpack.c.l.b16 %v113
  %v509 = vunpack.c.h.b16 %v113
  %v510 = vunpack.c.l.b16 %v114
  %v511 = vunpack.c.h.b16 %v114
  %v512 = vunpack.c.l.b16 %v115
  %v513 = vunpack.c.h.b16 %v115
  %v514 = vunpack.c.l.b16 %v116
  %v515 = vunpack.c.h.b16 %v116
  %v516 = vunpack.c.l.b16 %v117
  %v517 = vunpack.c.h.b16 %v117
  %v518 = vunpack.c.l.b16 %v118
  %v519 = vunpack.c.h.b16 %v118
  %v520 = vunpack.c.l.b16 %v119
  %v521 = vunpack.c.h.b16 %v119
  %v522 = vunpack.c.l.b16 %v120
  %v523 = vunpack.c.h.b16 %v120
  %v524 = vunpack.c.l.b16 %v121
  %v525 = vunpack.c.h.b16 %v121
  %v526 = vunpack.c.l.b16 %v122
  %v527 = vunpack.c.h.b16 %v122
  %v528 = vunpack.c.l.b16 %v123
  %v529 = vunpack.c.h.b16 %v123
  %v530 = vunpack.c.l.b16 %v124
  %v531 = vunpack.c.h.b16 %v124
  %v532 = vunpack.c.l.b16 %v125
  %v533 = vunpack.c.h.b16 %v125
  %v534 = vunpack.c.l.b16 %v126
  %v535 = vunpack.c.h.b16 %v126
  %v536 = vunpack.c.l.b16 %v127
  %v537 = vunpack.c.h.b16 %v127
  %v538 = vunpack.c.l.b16 %v128
  %v539 = vunpack.c.h.b16 %v128
  %v540 = vunpack.c.l.b16 %v129
  %v541 = vunpack.c.h.b16 %v129
  %v542 = vunpack.c.l.b16 %v130
  %v543 = vunpack.c.h.b16 %v130
  %v544 = vunpack.c.l.b16 %v131
  %v545 = vunpack.c.h.b16 %v131
  %v546 = vunpack.c.l.b16 %v132
  %v547 = vunpack.c.h.b16 %v132
  %v548 = vunpack.c.l.b16 %v133
  %v549 = vunpack.c.h.b16 %v133
  %v550 = vunpack.c.l.b16 %v134
  %v551 = vunpack.c.h.b16 %v134
  %v552 = vunpack.c.l.b16 %v135
  %v553 = vunpack.c.h.b16 %v135
  %v554 = vunpack.c.l.b16 %v136
  %v555 = vunpack.c.h.b16 %v136
  %v556 = vunpack.c.l.b16 %v137
  %v557 = vunpack.c.h.b16 %v137
  %v558 = vunpack.c.l.b16 %v138
  %v559 = vunpack.c.h.b16 %v138
  %v560 = vunpack.c.l.b16 %v139
  %v561 = vunpack.c.h.b16 %v139
  %v562 = vunpack.c.l.b16 %v140
  %v563 = vunpack.c.h.b16 %v140
  %v564 = vunpack.c.l.b16 %v141
  %v565 = vunpack.c.h.b16 %v141
  %v566 = vunpack.c.l.b16 %v142
  %v567 = vunpack.c.h.b16 %v142
  %v568 = vunpack.c.l.b16 %v143
  %v569 = vunpack.c.h.b16 %v143
  %v570 = vunpack.c.l.b16 %v144
  %v571 = vunpack.c.h.b16 %v144
  %v572 = vunpack.c.l.b16 %v145
  %v573 = vunpack.c.h.b16 %v145
  %v574 = vunpack.c.l.b16 %v146
  %v575 = vunpack.c.h.b16 %v146
  %v576 = vunpack.c.l.b16 %v147
  %v577 = vunpack.c.h.b16 %v147
  %v578 = vunpack.c.l.b16 %v148
  %v579 = vunpack.c.h.b16 %v148
  %v580 = vunpack.c.l.b16 %v149
  %v581 = vunpack.c.h.b16 %v149
  %v582 = vunpack.c.l.b16 %v150
  %v583 = vunpack.c.h.b16 %v150
  %v584 = vunpack.c.l.b16 %v151
  %v585 = vunpack.c.h.b16 %v151
  %v586 = vunpack.c.l.b16 %v152
  %v587 = vunpack.c.h.b16 %v152
  %v588 = vunpack.c.l.b16 %v153
  %v589 = vunpack.c.h.b16 %v153
  %v590 = vunpack.c.l.b16 %v154
  %v591 = vunpack.c.h.b16 %v154
  %v592 = vunpack.c.l.b16 %v155
  %v593 = vunpack.c.h.b16 %v155
  %v594 = vunpack.c.l.b16 %v156
  %v595 = vunpack.c.h.b16 %v156
  %v596 = vunpack.c.l.b16 %v157
  %v597 = vunpack.c.h.b16 %v157
  %v598 = vunpack.c.l.b16 %v158
  %v599 = vunpack.c.h.b16 %v158
  %v600 = vunpack.c.l.b16 %v159
  %v601 = vunpack.c.h.b16 %v159
  %v602 = vunpack.c.l.b16 %v160
  %v603 = vunpack.c.h.b16 %v160
  %v604 = vunpack.c.l.b16 %v161
  %v605 = vunpack.c.h.b16 %v161
  %v606 = vunpack.c.l.b16 %v162
  %v607 = vunpack.c.h.b16 %v162
  %v608 = vunpack.c.l.b16 %v163
  %v609 = vunpack.c.h.b16 %v163
  %v610 = vunpack.c.l.b16 %v164
  %v611 = vunpack.c.h.b16 %v164
  %v612 = vunpack.c.l.b16 %v165
  %v613 = vunpack.c.h.b16 %v165
  %v614 = vunpack.c.l.b16 %v166
  %v615 = vunpack.c.h.b16 %v166
  %v616 = vunpack.c.l.b16 %v167
  %v617 = vunpack.c.h.b16 %v167
  %v618 = vunpack.c.l.b16 %v168
  %v619 = vunpack.c.h.b16 %v168
  %v620 = vunpack.c.l.b16 %v169
  %v621 = vunpack.c.h.b16 %v169
  %v622 = vunpack.c.l.b16 %v170
  %v623 = vunpack.c.h.b16 %v170
  %v624 = vunpack.c.l.b16 %v171
  %v625 = vunpack.c.h.b16 %v171
  %v626 = vunpack.c.l.b16 %v172
  %v627 = vunpack.c.h.b16 %v172
  %v628 = vunpack.c.l.b16 %v173
  %v629 = vunpack.c.h.b16 %v173
  %v630 = vunpack.c.l.b16 %v174
  %v631 = vunpack.c.h.b16 %v174
  %v632 = vunpack.c.l.b16 %v175
  %v633 = vunpack.c.h.b16 %v175
  %v634 = vunpack.c.l.b16 %v176
  %v635 = vunpack.c.h.b16 %v176
  %v636 = vunpack.c.l.b16 %v177
  %v637 = vunpack.c.h.b16 %v177
  %v638 = vunpack.c.l.b16 %v178
  %v639 = vunpack.c.h.b16 %v178
  %v640 = vunpack.c.l.b16 %v179
  %v641 = vunpack.c.h.b16 %v179
  %v642 = vpack.c.b16 %v372, %v362
  %v643 = vpack.c.b16 %v373, %v363
  %v644 = vpack.c.b16 %v374, %v364
  %v645 = vpack.c.b16 %v375, %v365
  %v646 = vpack.c.b16 %v376, %v366
  %v647 = vpack.c.b16 %v377, %v367
  %v648 = vpack.c.b16 %v378, %v368
  %v649 = vpack.c.b16 %v379, %v369
  %v650 = vpack.c.b16 %v380, %v370
  %v651 = vpack.c.b16 %v381, %v371
  %v652 = vpack.c.b16 %v392, %v382
  %v653 = vpack.c.b16 %v393, %v383
  %v654 = vpack.c.b16 %v394, %v384
  %v655 = vpack.c.b16 %v395, %v385
  %v656 = vpack.c.b16 %v396, %v386
  %v657 = vpack.c.b16 %v397, %v387
  %v658 = vpack.c.b16 %v398, %v388
  %v659 = vpack.c.b16 %v399, %v389
  %v660 = vpack.c.b16 %v400, %v390
  %v661 = vpack.c.b16 %v401, %v391
  %v662 = vpack.c.b16 %v412, %v402
  %v663 = vpack.c.b16 %v413, %v403
  %v664 = vpack.c.b16 %v414, %v404
  %v665 = vpack.c.b16 %v415, %v405
  %v666 = vpack.c.b16 %v416, %v406
  %v667 = vpack.c.b16 %v417, %v407
  %v668 = vpack.c.b16 %v418, %v408
  %v669 = vpack.c.b16 %v419, %v409
  %v670 = vpack.c.b16 %v420, %v410
  %v671 = vpack.c.b16 %v421, %v411
  %v672 = vpack.c.b16 %v432, %v422
  %v673 = vpack.c.b16 %v433, %v423
  %v674 = vpack.c.b16 %v434, %v424
  %v675 = vpack.c.b16 %v435, %v425
  %v676 = vpack.c.b16 %v436, %v426
  %v677 = vpack.c.b16 %v437, %v427
  %v678 = vpack.c.b16 %v438, %v428
  %v679 = vpack.c.b16 %v439, %v429
  %v680 = vpack.c.b16 %v440, %v430
  %v681 = vpack.c.b16 %v441, %v431
  %v682 = vpack.c.b16 %v452, %v442
  %v683 = vpack.c.b16 %v453, %v443
  %v684 = vpack.c.b16 %v454, %v444
  %v685 = vpack.c.b16 %v455, %v445
  %v686 = vpack.c.b16 %v456, %v446
  %v687 = vpack.c.b16 %v457, %v447
  %v688 = vpack.c.b16 %v458, %v448
  %v689 = vpack.c.b16 %v459, %v449
  %v690 = vpack.c.b16 %v460, %v450
  %v691 = vpack.c.b16 %v461, %v451
  %v692 = vpack.c.b16 %v472, %v462
  %v693 = vpack.c.b16 %v473, %v463
  %v694 = vpack.c.b16 %v474, %v464
  %v695 = vpack.c.b16 %v475, %v465
  %v696 = vpack.c.b16 %v476, %v466
  %v697 = vpack.c.b16 %v477, %v467
  %v698 = vpack.c.b16 %v478, %v468
  %v699 = vpack.c.b16 %v479, %v469
  %v700 = vpack.c.b16 %v480, %v470
  %v701 = vpack.c.b16 %v481, %v471
  %v702 = vpack.c.b16 %v492, %v482
  %v703 = vpack.c.b16 %v493, %v483
  %v704 = vpack.c.b16 %v494, %v484
  %v705 = vpack.c.b16 %v495, %v485
  %v706 = vpack.c.b16 %v496, %v486
  %v707 = vpack.c.b16 %v497, %v487
  %v708 = vpack.c.b16 %v498, %v488
  %v709 = vpack.c.b16 %v499, %v489
  %v710 = vpack.c.b16 %v500, %v490
  %v711 = vpack.c.b16 %v501, %v491
  %v712 = vpack.c.b16 %v512, %v502
  %v713 = vpack.c.b16 %v513, %v503
  %v714 = vpack.c.b16 %v514, %v504
  %v715 = vpack.c.b16 %v515, %v505
  %v716 = vpack.c.b16 %v516, %v506
  %v717 = vpack.c.b16 %v517, %v507
  %v718 = vpack.c.b16 %v518, %v508
  %v719 = vpack.c.b16 %v519, %v509
  %v720 = vpack.c.b16 %v520, %v510
  %v721 = vpack.c.b16 %v521, %v511
  %v722 = vpack.c.b16 %v532, %v522
  %v723 = vpack.c.b16 %v533, %v523
  %v724 = vpack.c.b16 %v534, %v524
  %v725 = vpack.c.b16 %v535, %v525
  %v726 = vpack.c.b16 %v536, %v526
  %v727 = vpack.c.b16 %v537, %v527
  %v728 = vpack.c.b16 %v538, %v528
  %v729 = vpack.c.b16 %v539, %v529
  %v730 = vpack.c.b16 %v540, %v530
  %v731 = vpack.c.b16 %v541, %v531
  %v732 = vpack.c.b16 %v552, %v542
  %v733 = vpack.c.b16 %v553, %v543
  %v734 = vpack.c.b16 %v554, %v544
  %v735 = vpack.c.b16 %v555, %v545
  %v736 = vpack.c.b16 %v556, %v546
  %v737 = vpack.c.b16 %v557, %v547
  %v738 = vpack.c.b16 %v558, %v548
  %v739 = vpack.c.b16 %v559, %v549
  %v740 = vpack.c.b16 %v560, %v550
  %v741 = vpack.c.b16 %v561, %v551
  %v742 = vpack.c.b16 %v572, %v562
  %v743 = vpack.c.b16 %v573, %v563
  %v744 = vpack.c.b16 %v574, %v564
  %v745 = vpack.c.b16 %v575, %v565
  %v746 = vpack.c.b16 %v576, %v566
  %v747 = vpack.c.b16 %v577, %v567
  %v748 = vpack.c.b16 %v578, %v568
  %v749 = vpack.c.b16 %v579, %v569
  %v750 = vpack.c.b16 %v580, %v570
  %v751 = vpack.c.b16 %v581, %v571
  %v752 = vpack.c.b16 %v592, %v582
  %v753 = vpack.c.b16 %v593, %v583
  %v754 = vpack.c.b16 %v594, %v584
  %v755 = vpack.c.b16 %v595, %v585
  %v756 = vpack.c.b16 %v596, %v586
  %v757 = vpack.c.b16 %v597, %v587
  %v758 = vpack.c.b16 %v598, %v588
  %v759 = vpack.c.b16 %v599, %v589
  %v760 = vpack.c.b16 %v600, %v590
  %v761 = vpack.c.b16 %v601, %v591
  %v762 = vpack.c.b16 %v612, %v602
  %v763 = vpack.c.b16 %v613, %v603
  %v764 = vpack.c.b16 %v614, %v604
  %v765 = vpack.c.b16 %v615, %v605
  %v766 = vpack.c.b16 %v616, %v606
  %v767 = vpack.c.b16 %v617, %v607
  %v768 = vpack.c.b16 %v618, %v608
  %v769 = vpack.c.b16 %v619, %v609
  %v770 = vpack.c.b16 %v620, %v610
  %v771 = vpack.c.b16 %v621, %v611
  %v772 = vpack.c.b16 %v632, %v622
  %v773 = vpack.c.b16 %v633, %v623
  %v774 = vpack.c.b16 %v634, %v624
  %v775 = vpack.c.b16 %v635, %v625
  %v776 = vpack.c.b16 %v636, %v626
  %v777 = vpack.c.b16 %v637, %v627
  %v778 = vpack.c.b16 %v638, %v628
  %v779 = vpack.c.b16 %v639, %v629
  %v780 = vpack.c.b16 %v640, %v630
  %v781 = vpack.c.b16 %v641, %v631
  %vm922 = vcmask 785408
  %v924 = vsel %vm922, %v217, 0
  %v927 = vsel %vm922, %v219, 0
  %929 = vmatprep.subr.bf16.mxu0 %v713
  %930 = vmatpush1.bf16.msra.mxu0 %v712
  %931 = vmatprep.subr.bf16.mxu0 %v703
  %932 = vmatpush1.bf16.msra.mxu0 %v702
  %933 = vmatprep.subr.bf16.mxu0 %v693
  %934 = vmatpush1.bf16.msra.mxu0 %v692
  %935 = vmatprep.subr.bf16.mxu0 %v683
  %936 = vmatpush1.bf16.msra.mxu0 %v682
  %937 = vmatprep.subr.bf16.mxu0 %v673
  %938 = vmatpush1.bf16.msra.mxu0 %v672
  %939 = vmatprep.subr.bf16.mxu0 %v663
  %940 = vmatpush1.bf16.msra.mxu0 %v662
  %941 = vmatprep.subr.bf16.mxu0 %v653
  %942 = vmatpush1.bf16.msra.mxu0 %v652
  %943 = vmatprep.subr.bf16.mxu0 %v643
  %944 = vmatpush1.bf16.msra.mxu0 %v642
  %945 = vmatprep.subr.bf16.mxu0 0
  %946 = vmatpush2.bf16.msra.mxu0 0
  %947 = vmatprep.subr.bf16.mxu0 0
  %948 = vmatpush2.bf16.msra.mxu0 0
  %949 = vmatprep.subr.bf16.mxu0 %v773
  %950 = vmatpush2.bf16.msra.mxu0 %v772
  %951 = vmatprep.subr.bf16.mxu0 %v763
  %952 = vmatpush2.bf16.msra.mxu0 %v762
  %953 = vmatprep.subr.bf16.mxu0 %v753
  %954 = vmatpush2.bf16.msra.mxu0 %v752
  %955 = vmatprep.subr.bf16.mxu0 %v743
  %956 = vmatpush2.bf16.msra.mxu0 %v742
  %957 = vmatprep.subr.bf16.mxu0 %v733
  %958 = vmatpush2.bf16.msra.mxu0 %v732
  %959 = vmatprep.subr.bf16.mxu0 %v723
  %960 = vmatpush2.bf16.msra.mxu0 %v722
  %961 = vmatprep.mubr.bf16.mxu0 %v924
  %962 = vmatmul.mubr.bf16.gmra.mxu0 %v216
  %v963 = vpop.f32.mrf.mxu0
  %v964 = vadd.f32 %v187, %v963
  %v965 = vpop.f32.mrf.mxu0
  %v966 = vadd.f32 %v187, %v965
  %v967 = vpop.f32.mrf.mxu0
  %v968 = vadd.f32 %v192, %v967
  %v969 = vpop.f32.mrf.mxu0
  %v970 = vadd.f32 %v192, %v969
  %971 = vmatprep.mubr.bf16.mxu0 %v927
  %972 = vmatmul.mubr.bf16.gmra.mxu0 %v218
  %v973 = vpop.f32.mrf.mxu0
  %v974 = vadd.f32 %v197, %v973
  %v975 = vpop.f32.mrf.mxu0
  %v976 = vadd.f32 %v197, %v975
  %v977 = vpop.f32.mrf.mxu0
  %v978 = vadd.f32 %v202, %v977
  %v979 = vpop.f32.mrf.mxu0
  %v980 = vadd.f32 %v202, %v979
  %981 = vdwg.mxu0
  %982 = vmatprep.subr.bf16.mxu0 %v715
  %983 = vmatpush1.bf16.msra.mxu0 %v714
  %984 = vmatprep.subr.bf16.mxu0 %v705
  %985 = vmatpush1.bf16.msra.mxu0 %v704
  %986 = vmatprep.subr.bf16.mxu0 %v695
  %987 = vmatpush1.bf16.msra.mxu0 %v694
  %988 = vmatprep.subr.bf16.mxu0 %v685
  %989 = vmatpush1.bf16.msra.mxu0 %v684
  %990 = vmatprep.subr.bf16.mxu0 %v675
  %991 = vmatpush1.bf16.msra.mxu0 %v674
  %992 = vmatprep.subr.bf16.mxu0 %v665
  %993 = vmatpush1.bf16.msra.mxu0 %v664
  %994 = vmatprep.subr.bf16.mxu0 %v655
  %995 = vmatpush1.bf16.msra.mxu0 %v654
  %996 = vmatprep.subr.bf16.mxu0 %v645
  %997 = vmatpush1.bf16.msra.mxu0 %v644
  %998 = vmatprep.subr.bf16.mxu0 0
  %999 = vmatpush2.bf16.msra.mxu0 0
  %1000 = vmatprep.subr.bf16.mxu0 0
  %1001 = vmatpush2.bf16.msra.mxu0 0
  %1002 = vmatprep.subr.bf16.mxu0 %v775
  %1003 = vmatpush2.bf16.msra.mxu0 %v774
  %1004 = vmatprep.subr.bf16.mxu0 %v765
  %1005 = vmatpush2.bf16.msra.mxu0 %v764
  %1006 = vmatprep.subr.bf16.mxu0 %v755
  %1007 = vmatpush2.bf16.msra.mxu0 %v754
  %1008 = vmatprep.subr.bf16.mxu0 %v745
  %1009 = vmatpush2.bf16.msra.mxu0 %v744
  %1010 = vmatprep.subr.bf16.mxu0 %v735
  %1011 = vmatpush2.bf16.msra.mxu0 %v734
  %1012 = vmatprep.subr.bf16.mxu0 %v725
  %1013 = vmatpush2.bf16.msra.mxu0 %v724
  %1014 = vmatprep.mubr.bf16.mxu0 %v924
  %1015 = vmatmul.mubr.bf16.gmra.mxu0 %v216
  %v1016 = vpop.f32.mrf.mxu0
  %v1017 = vadd.f32 %v187, %v1016
  %v1018 = vpop.f32.mrf.mxu0
  %v1019 = vadd.f32 %v187, %v1018
  %v1020 = vpop.f32.mrf.mxu0
  %v1021 = vadd.f32 %v192, %v1020
  %v1022 = vpop.f32.mrf.mxu0
  %v1023 = vadd.f32 %v192, %v1022
  %1024 = vmatprep.mubr.bf16.mxu0 %v927
  %1025 = vmatmul.mubr.bf16.gmra.mxu0 %v218
  %v1026 = vpop.f32.mrf.mxu0
  %v1027 = vadd.f32 %v197, %v1026
  %v1028 = vpop.f32.mrf.mxu0
  %v1029 = vadd.f32 %v197, %v1028
  %v1030 = vpop.f32.mrf.mxu0
  %v1031 = vadd.f32 %v202, %v1030
  %v1032 = vpop.f32.mrf.mxu0
  %v1033 = vadd.f32 %v202, %v1032
  %1034 = vdwg.mxu0
  %1035 = vmatprep.subr.bf16.mxu0 %v717
  %1036 = vmatpush1.bf16.msra.mxu0 %v716
  %1037 = vmatprep.subr.bf16.mxu0 %v707
  %1038 = vmatpush1.bf16.msra.mxu0 %v706
  %1039 = vmatprep.subr.bf16.mxu0 %v697
  %1040 = vmatpush1.bf16.msra.mxu0 %v696
  %1041 = vmatprep.subr.bf16.mxu0 %v687
  %1042 = vmatpush1.bf16.msra.mxu0 %v686
  %1043 = vmatprep.subr.bf16.mxu0 %v677
  %1044 = vmatpush1.bf16.msra.mxu0 %v676
  %1045 = vmatprep.subr.bf16.mxu0 %v667
  %1046 = vmatpush1.bf16.msra.mxu0 %v666
  %1047 = vmatprep.subr.bf16.mxu0 %v657
  %1048 = vmatpush1.bf16.msra.mxu0 %v656
  %1049 = vmatprep.subr.bf16.mxu0 %v647
  %1050 = vmatpush1.bf16.msra.mxu0 %v646
  %1051 = vmatprep.subr.bf16.mxu0 0
  %1052 = vmatpush2.bf16.msra.mxu0 0
  %1053 = vmatprep.subr.bf16.mxu0 0
  %1054 = vmatpush2.bf16.msra.mxu0 0
  %1055 = vmatprep.subr.bf16.mxu0 %v777
  %1056 = vmatpush2.bf16.msra.mxu0 %v776
  %1057 = vmatprep.subr.bf16.mxu0 %v767
  %1058 = vmatpush2.bf16.msra.mxu0 %v766
  %1059 = vmatprep.subr.bf16.mxu0 %v757
  %1060 = vmatpush2.bf16.msra.mxu0 %v756
  %1061 = vmatprep.subr.bf16.mxu0 %v747
  %1062 = vmatpush2.bf16.msra.mxu0 %v746
  %1063 = vmatprep.subr.bf16.mxu0 %v737
  %1064 = vmatpush2.bf16.msra.mxu0 %v736
  %1065 = vmatprep.subr.bf16.mxu0 %v727
  %1066 = vmatpush2.bf16.msra.mxu0 %v726
  %1067 = vmatprep.mubr.bf16.mxu0 %v924
  %1068 = vmatmul.mubr.bf16.gmra.mxu0 %v216
  %v1069 = vpop.f32.mrf.mxu0
  %v1070 = vadd.f32 %v187, %v1069
  %v1071 = vpop.f32.mrf.mxu0
  %v1072 = vadd.f32 %v187, %v1071
  %v1073 = vpop.f32.mrf.mxu0
  %v1074 = vadd.f32 %v192, %v1073
  %v1075 = vpop.f32.mrf.mxu0
  %v1076 = vadd.f32 %v192, %v1075
  %1077 = vmatprep.mubr.bf16.mxu0 %v927
  %1078 = vmatmul.mubr.bf16.gmra.mxu0 %v218
  %v1079 = vpop.f32.mrf.mxu0
  %v1080 = vadd.f32 %v197, %v1079
  %v1081 = vpop.f32.mrf.mxu0
  %v1082 = vadd.f32 %v197, %v1081
  %v1083 = vpop.f32.mrf.mxu0
  %v1084 = vadd.f32 %v202, %v1083
  %v1085 = vpop.f32.mrf.mxu0
  %v1086 = vadd.f32 %v202, %v1085
  %1087 = vdwg.mxu0
  %1088 = vmatprep.subr.bf16.mxu0 %v719
  %1089 = vmatpush1.bf16.msra.mxu0 %v718
  %1090 = vmatprep.subr.bf16.mxu0 %v709
  %1091 = vmatpush1.bf16.msra.mxu0 %v708
  %1092 = vmatprep.subr.bf16.mxu0 %v699
  %1093 = vmatpush1.bf16.msra.mxu0 %v698
  %1094 = vmatprep.subr.bf16.mxu0 %v689
  %1095 = vmatpush1.bf16.msra.mxu0 %v688
  %1096 = vmatprep.subr.bf16.mxu0 %v679
  %1097 = vmatpush1.bf16.msra.mxu0 %v678
  %1098 = vmatprep.subr.bf16.mxu0 %v669
  %1099 = vmatpush1.bf16.msra.mxu0 %v668
  %1100 = vmatprep.subr.bf16.mxu0 %v659
  %1101 = vmatpush1.bf16.msra.mxu0 %v658
  %1102 = vmatprep.subr.bf16.mxu0 %v649
  %1103 = vmatpush1.bf16.msra.mxu0 %v648
  %1104 = vmatprep.subr.bf16.mxu0 0
  %1105 = vmatpush2.bf16.msra.mxu0 0
  %1106 = vmatprep.subr.bf16.mxu0 0
  %1107 = vmatpush2.bf16.msra.mxu0 0
  %1108 = vmatprep.subr.bf16.mxu0 %v779
  %1109 = vmatpush2.bf16.msra.mxu0 %v778
  %1110 = vmatprep.subr.bf16.mxu0 %v769
  %1111 = vmatpush2.bf16.msra.mxu0 %v768
  %1112 = vmatprep.subr.bf16.mxu0 %v759
  %1113 = vmatpush2.bf16.msra.mxu0 %v758
  %1114 = vmatprep.subr.bf16.mxu0 %v749
  %1115 = vmatpush2.bf16.msra.mxu0 %v748
  %1116 = vmatprep.subr.bf16.mxu0 %v739
  %1117 = vmatpush2.bf16.msra.mxu0 %v738
  %1118 = vmatprep.subr.bf16.mxu0 %v729
  %1119 = vmatpush2.bf16.msra.mxu0 %v728
  %1120 = vmatprep.mubr.bf16.mxu0 %v924
  %1121 = vmatmul.mubr.bf16.gmra.mxu0 %v216
  %v1122 = vpop.f32.mrf.mxu0
  %v1123 = vadd.f32 %v187, %v1122
  %v1124 = vpop.f32.mrf.mxu0
  %v1125 = vadd.f32 %v187, %v1124
  %v1126 = vpop.f32.mrf.mxu0
  %v1127 = vadd.f32 %v192, %v1126
  %v1128 = vpop.f32.mrf.mxu0
  %v1129 = vadd.f32 %v192, %v1128
  %1130 = vmatprep.mubr.bf16.mxu0 %v927
  %1131 = vmatmul.mubr.bf16.gmra.mxu0 %v218
  %v1132 = vpop.f32.mrf.mxu0
  %v1133 = vadd.f32 %v197, %v1132
  %v1134 = vpop.f32.mrf.mxu0
  %v1135 = vadd.f32 %v197, %v1134
  %v1136 = vpop.f32.mrf.mxu0
  %v1137 = vadd.f32 %v202, %v1136
  %v1138 = vpop.f32.mrf.mxu0
  %v1139 = vadd.f32 %v202, %v1138
  %1140 = vdwg.mxu0
  %1141 = vmatprep.subr.bf16.mxu0 %v721
  %1142 = vmatpush1.bf16.msra.mxu0 %v720
  %1143 = vmatprep.subr.bf16.mxu0 %v711
  %1144 = vmatpush1.bf16.msra.mxu0 %v710
  %1145 = vmatprep.subr.bf16.mxu0 %v701
  %1146 = vmatpush1.bf16.msra.mxu0 %v700
  %1147 = vmatprep.subr.bf16.mxu0 %v691
  %1148 = vmatpush1.bf16.msra.mxu0 %v690
  %1149 = vmatprep.subr.bf16.mxu0 %v681
  %1150 = vmatpush1.bf16.msra.mxu0 %v680
  %1151 = vmatprep.subr.bf16.mxu0 %v671
  %1152 = vmatpush1.bf16.msra.mxu0 %v670
  %1153 = vmatprep.subr.bf16.mxu0 %v661
  %1154 = vmatpush1.bf16.msra.mxu0 %v660
  %1155 = vmatprep.subr.bf16.mxu0 %v651
  %1156 = vmatpush1.bf16.msra.mxu0 %v650
  %1157 = vmatprep.subr.bf16.mxu0 0
  %1158 = vmatpush2.bf16.msra.mxu0 0
  %1159 = vmatprep.subr.bf16.mxu0 0
  %1160 = vmatpush2.bf16.msra.mxu0 0
  %1161 = vmatprep.subr.bf16.mxu0 %v781
  %1162 = vmatpush2.bf16.msra.mxu0 %v780
  %1163 = vmatprep.subr.bf16.mxu0 %v771
  %1164 = vmatpush2.bf16.msra.mxu0 %v770
  %1165 = vmatprep.subr.bf16.mxu0 %v761
  %1166 = vmatpush2.bf16.msra.mxu0 %v760
  %1167 = vmatprep.subr.bf16.mxu0 %v751
  %1168 = vmatpush2.bf16.msra.mxu0 %v750
  %1169 = vmatprep.subr.bf16.mxu0 %v741
  %1170 = vmatpush2.bf16.msra.mxu0 %v740
  %1171 = vmatprep.subr.bf16.mxu0 %v731
  %1172 = vmatpush2.bf16.msra.mxu0 %v730
  %1173 = vmatprep.mubr.bf16.mxu0 %v924
  %1174 = vmatmul.mubr.bf16.gmra.mxu0 %v216
  %v1175 = vpop.f32.mrf.mxu0
  %v1176 = vadd.f32 %v187, %v1175
  %v1177 = vpop.f32.mrf.mxu0
  %v1178 = vadd.f32 %v187, %v1177
  %v1179 = vpop.f32.mrf.mxu0
  %v1180 = vadd.f32 %v192, %v1179
  %v1181 = vpop.f32.mrf.mxu0
  %v1182 = vadd.f32 %v192, %v1181
  %1183 = vmatprep.mubr.bf16.mxu0 %v927
  %1184 = vmatmul.mubr.bf16.gmra.mxu0 %v218
  %v1185 = vpop.f32.mrf.mxu0
  %v1186 = vadd.f32 %v197, %v1185
  %v1187 = vpop.f32.mrf.mxu0
  %v1188 = vadd.f32 %v197, %v1187
  %v1189 = vpop.f32.mrf.mxu0
  %v1190 = vadd.f32 %v202, %v1189
  %v1191 = vpop.f32.mrf.mxu0
  %v1192 = vadd.f32 %v202, %v1191
  %1193 = vdwg.mxu0
  %v1194 = vmax.f32 %v964, 0.0
  %v1195 = vmax.f32 %v966, 0.0
  %v1196 = vmax.f32 %v1017, 0.0
  %v1197 = vmax.f32 %v1019, 0.0
  %v1198 = vmax.f32 %v1070, 0.0
  %v1199 = vmax.f32 %v1072, 0.0
  %v1200 = vmax.f32 %v1123, 0.0
  %v1201 = vmax.f32 %v1125, 0.0
  %v1202 = vmax.f32 %v1176, 0.0
  %v1203 = vmax.f32 %v1178, 0.0
  %v1204 = vmax.f32 %v968, 0.0
  %v1205 = vmax.f32 %v970, 0.0
  %v1206 = vmax.f32 %v1021, 0.0
  %v1207 = vmax.f32 %v1023, 0.0
  %v1208 = vmax.f32 %v1074, 0.0
  %v1209 = vmax.f32 %v1076, 0.0
  %v1210 = vmax.f32 %v1127, 0.0
  %v1211 = vmax.f32 %v1129, 0.0
  %v1212 = vmax.f32 %v1180, 0.0
  %v1213 = vmax.f32 %v1182, 0.0
  %v1214 = vmax.f32 %v974, 0.0
  %v1215 = vmax.f32 %v976, 0.0
  %v1216 = vmax.f32 %v1027, 0.0
  %v1217 = vmax.f32 %v1029, 0.0
  %v1218 = vmax.f32 %v1080, 0.0
  %v1219 = vmax.f32 %v1082, 0.0
  %v1220 = vmax.f32 %v1133, 0.0
  %v1221 = vmax.f32 %v1135, 0.0
  %v1222 = vmax.f32 %v1186, 0.0
  %v1223 = vmax.f32 %v1188, 0.0
  %v1224 = vmax.f32 %v978, 0.0
  %v1225 = vmax.f32 %v980, 0.0
  %v1226 = vmax.f32 %v1031, 0.0
  %v1227 = vmax.f32 %v1033, 0.0
  %v1228 = vmax.f32 %v1084, 0.0
  %v1229 = vmax.f32 %v1086, 0.0
  %v1230 = vmax.f32 %v1137, 0.0
  %v1231 = vmax.f32 %v1139, 0.0
  %v1232 = vmax.f32 %v1190, 0.0
  %v1233 = vmax.f32 %v1192, 0.0
  %v1234 = vld [vmem:[%s1] sm:$0xff]
  %v1235 = vld [vmem:[%s1 + $0x8] sm:$0xff]
  %v1236 = vld [vmem:[%s1 + $0x10] sm:$0xff]
  %v1237 = vld [vmem:[%s1 + $0x18] sm:$0xff]
  %v1238 = vld [vmem:[%s1 + $0x20] sm:$0xff]
  %v1239 = vld [vmem:[%s1 + $0x28] sm:$0xff]
  %v1240 = vld [vmem:[%s1 + $0x30] sm:$0xff]
  %v1241 = vld [vmem:[%s1 + $0x38] sm:$0xff]
  %v1242 = vld [vmem:[%s1 + $0x40] sm:$0xff]
  %v1243 = vld [vmem:[%s1 + $0x48] sm:$0xff]
  %v1244 = vld [vmem:[%s1 + $0x50] sm:$0xff]
  %v1245 = vld [vmem:[%s1 + $0x58] sm:$0xff]
  %v1246 = vld [vmem:[%s1 + $0x60] sm:$0xff]
  %v1247 = vld [vmem:[%s1 + $0x68] sm:$0xff]
  %v1248 = vld [vmem:[%s1 + $0x70] sm:$0xff]
  %v1249 = vld [vmem:[%s1 + $0x78] sm:$0xff]
  %v1250 = vld [vmem:[%s1 + $0x80] sm:$0xff]
  %v1251 = vld [vmem:[%s1 + $0x88] sm:$0xff]
  %v1252 = vld [vmem:[%s1 + $0x90] sm:$0xff]
  %v1253 = vld [vmem:[%s1 + $0x98] sm:$0xff]
  %v1254 = vld [vmem:[%s1 + $0xa0] sm:$0xff]
  %v1255 = vld [vmem:[%s1 + $0xa8] sm:$0xff]
  %v1256 = vld [vmem:[%s1 + $0xb0] sm:$0xff]
  %v1257 = vld [vmem:[%s1 + $0xb8] sm:$0xff]
  %v1258 = vld [vmem:[%s1 + $0xc0] sm:$0xff]
  %v1259 = vld [vmem:[%s1 + $0xc8] sm:$0xff]
  %v1260 = vld [vmem:[%s1 + $0xd0] sm:$0xff]
  %v1261 = vld [vmem:[%s1 + $0xd8] sm:$0xff]
  %v1262 = vld [vmem:[%s1 + $0xe0] sm:$0xff]
  %v1263 = vld [vmem:[%s1 + $0xe8] sm:$0xff]
  %v1264 = vld [vmem:[%s1 + $0xf0] sm:$0xff]
  %v1265 = vld [vmem:[%s1 + $0xf8] sm:$0xff]
  %v1266 = vld [vmem:[%s1 + $0x100] sm:$0xff]
  %v1267 = vld [vmem:[%s1 + $0x108] sm:$0xff]
  %v1268 = vld [vmem:[%s1 + $0x110] sm:$0xff]
  %v1269 = vld [vmem:[%s1 + $0x118] sm:$0xff]
  %v1270 = vld [vmem:[%s1 + $0x120] sm:$0xff]
  %v1271 = vld [vmem:[%s1 + $0x128] sm:$0xff]
  %v1272 = vld [vmem:[%s1 + $0x130] sm:$0xff]
  %v1273 = vld [vmem:[%s1 + $0x138] sm:$0xff]
  %v1274 = vld [vmem:[%s1 + $0x140] sm:$0xff]
  %v1275 = vld [vmem:[%s1 + $0x148] sm:$0xff]
  %v1276 = vld [vmem:[%s1 + $0x150] sm:$0xff]
  %v1277 = vld [vmem:[%s1 + $0x158] sm:$0xff]
  %v1278 = vld [vmem:[%s1 + $0x160] sm:$0xff]
  %v1279 = vld [vmem:[%s1 + $0x168] sm:$0xff]
  %v1280 = vld [vmem:[%s1 + $0x170] sm:$0xff]
  %v1281 = vld [vmem:[%s1 + $0x178] sm:$0xff]
  %v1282 = vld [vmem:[%s1 + $0x180] sm:$0xff]
  %v1283 = vld [vmem:[%s1 + $0x188] sm:$0xff]
  %v1284 = vld [vmem:[%s1 + $0x190] sm:$0xff]
  %v1285 = vld [vmem:[%s1 + $0x198] sm:$0xff]
  %v1286 = vld [vmem:[%s1 + $0x1a0] sm:$0xff]
  %v1287 = vld [vmem:[%s1 + $0x1a8] sm:$0xff]
  %v1288 = vld [vmem:[%s1 + $0x1b0] sm:$0xff]
  %v1289 = vld [vmem:[%s1 + $0x1b8] sm:$0xff]
  %v1290 = vld [vmem:[%s1 + $0x1c0] sm:$0xff]
  %v1291 = vld [vmem:[%s1 + $0x1c8] sm:$0xff]
  %v1292 = vld [vmem:[%s1 + $0x1d0] sm:$0xff]
  %v1293 = vld [vmem:[%s1 + $0x1d8] sm:$0xff]
  %v1294 = vld [vmem:[%s1 + $0x1e0] sm:$0xff]
  %v1295 = vld [vmem:[%s1 + $0x1e8] sm:$0xff]
  %v1296 = vld [vmem:[%s1 + $0x1f0] sm:$0xff]
  %v1297 = vld [vmem:[%s1 + $0x1f8] sm:$0xff]
  %v1298 = vld [vmem:[%s1 + $0x200] sm:$0xff]
  %v1299 = vld [vmem:[%s1 + $0x208] sm:$0xff]
  %v1300 = vld [vmem:[%s1 + $0x210] sm:$0xff]
  %v1301 = vld [vmem:[%s1 + $0x218] sm:$0xff]
  %v1302 = vld [vmem:[%s1 + $0x220] sm:$0xff]
  %v1303 = vld [vmem:[%s1 + $0x228] sm:$0xff]
  %v1304 = vld [vmem:[%s1 + $0x230] sm:$0xff]
  %v1305 = vld [vmem:[%s1 + $0x238] sm:$0xff]
  %v1306 = vld [vmem:[%s1 + $0x240] sm:$0xff]
  %v1307 = vld [vmem:[%s1 + $0x248] sm:$0xff]
  %v1308 = vld [vmem:[%s1 + $0x250] sm:$0xff]
  %v1309 = vld [vmem:[%s1 + $0x258] sm:$0xff]
  %v1310 = vld [vmem:[%s1 + $0x260] sm:$0xff]
  %v1311 = vld [vmem:[%s1 + $0x268] sm:$0xff]
  %v1312 = vld [vmem:[%s1 + $0x270] sm:$0xff]
  %v1313 = vld [vmem:[%s1 + $0x278] sm:$0xff]
  %v1314 = vld [vmem:[%s1 + $0x280] sm:$0xff]
  %v1315 = vld [vmem:[%s1 + $0x288] sm:$0xff]
  %v1316 = vld [vmem:[%s1 + $0x290] sm:$0xff]
  %v1317 = vld [vmem:[%s1 + $0x298] sm:$0xff]
  %v1318 = vld [vmem:[%s1 + $0x2a0] sm:$0xff]
  %v1319 = vld [vmem:[%s1 + $0x2a8] sm:$0xff]
  %v1320 = vld [vmem:[%s1 + $0x2b0] sm:$0xff]
  %v1321 = vld [vmem:[%s1 + $0x2b8] sm:$0xff]
  %v1322 = vld [vmem:[%s1 + $0x2c0] sm:$0xff]
  %v1323 = vld [vmem:[%s1 + $0x2c8] sm:$0xff]
  %v1324 = vld [vmem:[%s1 + $0x2d0] sm:$0xff]
  %v1325 = vld [vmem:[%s1 + $0x2d8] sm:$0xff]
  %v1326 = vld [vmem:[%s1 + $0x2e0] sm:$0xff]
  %v1327 = vld [vmem:[%s1 + $0x2e8] sm:$0xff]
  %v1328 = vld [vmem:[%s1 + $0x2f0] sm:$0xff]
  %v1329 = vld [vmem:[%s1 + $0x2f8] sm:$0xff]
  %v1330 = vld [vmem:[%s1 + $0x300] sm:$0xff]
  %v1331 = vld [vmem:[%s1 + $0x308] sm:$0xff]
  %v1332 = vld [vmem:[%s1 + $0x310] sm:$0xff]
  %v1333 = vld [vmem:[%s1 + $0x318] sm:$0xff]
  %v1334 = vld [vmem:[%s1 + $0x320] sm:$0xff]
  %v1335 = vld [vmem:[%s1 + $0x328] sm:$0xff]
  %v1336 = vld [vmem:[%s1 + $0x330] sm:$0xff]
  %v1337 = vld [vmem:[%s1 + $0x338] sm:$0xff]
  %v1338 = vld [vmem:[%s1 + $0x340] sm:$0xff]
  %v1339 = vld [vmem:[%s1 + $0x348] sm:$0xff]
  %v1340 = vld [vmem:[%s1 + $0x350] sm:$0xff]
  %v1341 = vld [vmem:[%s1 + $0x358] sm:$0xff]
  %v1342 = vld [vmem:[%s1 + $0x360] sm:$0xff]
  %v1343 = vld [vmem:[%s1 + $0x368] sm:$0xff]
  %v1344 = vld [vmem:[%s1 + $0x370] sm:$0xff]
  %v1345 = vld [vmem:[%s1 + $0x378] sm:$0xff]
  %v1346 = vld [vmem:[%s1 + $0x380] sm:$0xff]
  %v1347 = vld [vmem:[%s1 + $0x388] sm:$0xff]
  %v1348 = vld [vmem:[%s1 + $0x390] sm:$0xff]
  %v1349 = vld [vmem:[%s1 + $0x398] sm:$0xff]
  %v1350 = vld [vmem:[%s1 + $0x3a0] sm:$0xff]
  %v1351 = vld [vmem:[%s1 + $0x3a8] sm:$0xff]
  %v1352 = vld [vmem:[%s1 + $0x3b0] sm:$0xff]
  %v1353 = vld [vmem:[%s1 + $0x3b8] sm:$0xff]
  %v1354 = vld [vmem:[%s1 + $0x3c0] sm:$0xff]
  %v1355 = vld [vmem:[%s1 + $0x3c8] sm:$0xff]
  %v1356 = vld [vmem:[%s1 + $0x3d0] sm:$0xff]
  %v1357 = vld [vmem:[%s1 + $0x3d8] sm:$0xff]
  %v1358 = vld [vmem:[%s1 + $0x3e0] sm:$0xff]
  %v1359 = vld [vmem:[%s1 + $0x3e8] sm:$0xff]
  %v1360 = vld [vmem:[%s1 + $0x3f0] sm:$0xff]
  %v1361 = vld [vmem:[%s1 + $0x3f8] sm:$0xff]
  %v1362 = vld [vmem:[%s1 + $0x400] sm:$0xff]
  %v1363 = vld [vmem:[%s1 + $0x408] sm:$0xff]
  %v1364 = vld [vmem:[%s1 + $0x410] sm:$0xff]
  %v1365 = vld [vmem:[%s1 + $0x418] sm:$0xff]
  %v1366 = vld [vmem:[%s1 + $0x420] sm:$0xff]
  %v1367 = vld [vmem:[%s1 + $0x428] sm:$0xff]
  %v1368 = vld [vmem:[%s1 + $0x430] sm:$0xff]
  %v1369 = vld [vmem:[%s1 + $0x438] sm:$0xff]
  %v1370 = vld [vmem:[%s1 + $0x440] sm:$0xff]
  %v1371 = vld [vmem:[%s1 + $0x448] sm:$0xff]
  %v1372 = vld [vmem:[%s1 + $0x450] sm:$0xff]
  %v1373 = vld [vmem:[%s1 + $0x458] sm:$0xff]
  %v1374 = vld [vmem:[%s1 + $0x460] sm:$0xff]
  %v1375 = vld [vmem:[%s1 + $0x468] sm:$0xff]
  %v1376 = vld [vmem:[%s1 + $0x470] sm:$0xff]
  %v1377 = vld [vmem:[%s1 + $0x478] sm:$0xff]
  %v1378 = vld [vmem:[%s1 + $0x480] sm:$0xff]
  %v1379 = vld [vmem:[%s1 + $0x488] sm:$0xff]
  %v1380 = vld [vmem:[%s1 + $0x490] sm:$0xff]
  %v1381 = vld [vmem:[%s1 + $0x498] sm:$0xff]
  %v1382 = vld [vmem:[%s1 + $0x4a0] sm:$0xff]
  %v1383 = vld [vmem:[%s1 + $0x4a8] sm:$0xff]
  %v1384 = vld [vmem:[%s1 + $0x4b0] sm:$0xff]
  %v1385 = vld [vmem:[%s1 + $0x4b8] sm:$0xff]
  %v1386 = vld [vmem:[%s1 + $0x4c0] sm:$0xff]
  %v1387 = vld [vmem:[%s1 + $0x4c8] sm:$0xff]
  %v1388 = vld [vmem:[%s1 + $0x4d0] sm:$0xff]
  %v1389 = vld [vmem:[%s1 + $0x4d8] sm:$0xff]
  %v1390 = vld [vmem:[%s1 + $0x4e0] sm:$0xff]
  %v1391 = vld [vmem:[%s1 + $0x4e8] sm:$0xff]
  %v1392 = vld [vmem:[%s1 + $0x4f0] sm:$0xff]
  %v1393 = vld [vmem:[%s1 + $0x4f8] sm:$0xff]
  %1394 = vmatprep.subr.mxu0 0.0
  %1395 = vmatpush1.msra.mxu0 %v1249
  %1396 = vmatprep.subr.mxu0 0.0
  %1397 = vmatpush1.msra.mxu0 %v1248
  %1398 = vmatprep.subr.mxu0 0.0
  %1399 = vmatpush1.msra.mxu0 %v1247
  %1400 = vmatprep.subr.mxu0 0.0
  %1401 = vmatpush1.msra.mxu0 %v1246
  %1402 = vmatprep.subr.mxu0 0.0
  %1403 = vmatpush1.msra.mxu0 %v1245
  %1404 = vmatprep.subr.mxu0 0.0
  %1405 = vmatpush1.msra.mxu0 %v1244
  %1406 = vmatprep.subr.mxu0 0.0
  %1407 = vmatpush1.msra.mxu0 %v1243
  %1408 = vmatprep.subr.mxu0 0.0
  %1409 = vmatpush1.msra.mxu0 %v1242
  %1410 = vmatprep.subr.mxu0 0.0
  %1411 = vmatpush1.msra.mxu0 %v1241
  %1412 = vmatprep.subr.mxu0 0.0
  %1413 = vmatpush1.msra.mxu0 %v1240
  %1414 = vmatprep.subr.mxu0 0.0
  %1415 = vmatpush1.msra.mxu0 %v1239
  %1416 = vmatprep.subr.mxu0 0.0
  %1417 = vmatpush1.msra.mxu0 %v1238
  %1418 = vmatprep.subr.mxu0 0.0
  %1419 = vmatpush1.msra.mxu0 %v1237
  %1420 = vmatprep.subr.mxu0 0.0
  %1421 = vmatpush1.msra.mxu0 %v1236
  %1422 = vmatprep.subr.mxu0 0.0
  %1423 = vmatpush1.msra.mxu0 %v1235
  %1424 = vmatprep.subr.mxu0 0.0
  %1425 = vmatpush1.msra.mxu0 %v1234
  %1426 = vmatprep.subr.mxu0 0.0
  %1427 = vmatpush2.msra.mxu0 %v1265
  %1428 = vmatprep.subr.mxu0 0.0
  %1429 = vmatpush2.msra.mxu0 %v1264
  %1430 = vmatprep.subr.mxu0 0.0
  %1431 = vmatpush2.msra.mxu0 %v1263
  %1432 = vmatprep.subr.mxu0 0.0
  %1433 = vmatpush2.msra.mxu0 %v1262
  %1434 = vmatprep.subr.mxu0 0.0
  %1435 = vmatpush2.msra.mxu0 %v1261
  %1436 = vmatprep.subr.mxu0 0.0
  %1437 = vmatpush2.msra.mxu0 %v1260
  %1438 = vmatprep.subr.mxu0 0.0
  %1439 = vmatpush2.msra.mxu0 %v1259
  %1440 = vmatprep.subr.mxu0 0.0
  %1441 = vmatpush2.msra.mxu0 %v1258
  %1442 = vmatprep.subr.mxu0 0.0
  %1443 = vmatpush2.msra.mxu0 %v1257
  %1444 = vmatprep.subr.mxu0 0.0
  %1445 = vmatpush2.msra.mxu0 %v1256
  %1446 = vmatprep.subr.mxu0 0.0
  %1447 = vmatpush2.msra.mxu0 %v1255
  %1448 = vmatprep.subr.mxu0 0.0
  %1449 = vmatpush2.msra.mxu0 %v1254
  %1450 = vmatprep.subr.mxu0 0.0
  %1451 = vmatpush2.msra.mxu0 %v1253
  %1452 = vmatprep.subr.mxu0 0.0
  %1453 = vmatpush2.msra.mxu0 %v1252
  %1454 = vmatprep.subr.mxu0 0.0
  %1455 = vmatpush2.msra.mxu0 %v1251
  %1456 = vmatprep.subr.mxu0 0.0
  %1457 = vmatpush2.msra.mxu0 %v1250
  %1458 = vmatprep.mubr.f32.mxu0 %v1195
  %1459 = vmatmul.mubr.f32.gmra.mxu0 %v1194
  %v1460 = vpop.f32.mrf.mxu0
  %v1461 = vadd.f32 0.0, %v1460
  %v1462 = vpop.f32.mrf.mxu0
  %1463 = vmatprep.mubr.f32.mxu0 %v1205
  %1464 = vmatmul.mubr.f32.gmra.mxu0 %v1204
  %v1465 = vpop.f32.mrf.mxu0
  %v1466 = vadd.f32 0.0, %v1465
  %v1467 = vpop.f32.mrf.mxu0
  %1468 = vmatprep.mubr.f32.mxu0 %v1215
  %1469 = vmatmul.mubr.f32.gmra.mxu0 %v1214
  %v1470 = vpop.f32.mrf.mxu0
  %v1471 = vadd.f32 0.0, %v1470
  %v1472 = vpop.f32.mrf.mxu0
  %1473 = vmatprep.mubr.f32.mxu0 %v1225
  %1474 = vmatmul.mubr.f32.gmra.mxu0 %v1224
  %v1475 = vpop.f32.mrf.mxu0
  %v1476 = vadd.f32 0.0, %v1475
  %v1477 = vpop.f32.mrf.mxu0
  %1478 = vdwg.mxu0
  %1479 = vmatprep.subr.mxu0 0.0
  %1480 = vmatpush1.msra.mxu0 %v1281
  %1481 = vmatprep.subr.mxu0 0.0
  %1482 = vmatpush1.msra.mxu0 %v1280
  %1483 = vmatprep.subr.mxu0 0.0
  %1484 = vmatpush1.msra.mxu0 %v1279
  %1485 = vmatprep.subr.mxu0 0.0
  %1486 = vmatpush1.msra.mxu0 %v1278
  %1487 = vmatprep.subr.mxu0 0.0
  %1488 = vmatpush1.msra.mxu0 %v1277
  %1489 = vmatprep.subr.mxu0 0.0
  %1490 = vmatpush1.msra.mxu0 %v1276
  %1491 = vmatprep.subr.mxu0 0.0
  %1492 = vmatpush1.msra.mxu0 %v1275
  %1493 = vmatprep.subr.mxu0 0.0
  %1494 = vmatpush1.msra.mxu0 %v1274
  %1495 = vmatprep.subr.mxu0 0.0
  %1496 = vmatpush1.msra.mxu0 %v1273
  %1497 = vmatprep.subr.mxu0 0.0
  %1498 = vmatpush1.msra.mxu0 %v1272
  %1499 = vmatprep.subr.mxu0 0.0
  %1500 = vmatpush1.msra.mxu0 %v1271
  %1501 = vmatprep.subr.mxu0 0.0
  %1502 = vmatpush1.msra.mxu0 %v1270
  %1503 = vmatprep.subr.mxu0 0.0
  %1504 = vmatpush1.msra.mxu0 %v1269
  %1505 = vmatprep.subr.mxu0 0.0
  %1506 = vmatpush1.msra.mxu0 %v1268
  %1507 = vmatprep.subr.mxu0 0.0
  %1508 = vmatpush1.msra.mxu0 %v1267
  %1509 = vmatprep.subr.mxu0 0.0
  %1510 = vmatpush1.msra.mxu0 %v1266
  %1511 = vmatprep.subr.mxu0 0.0
  %1512 = vmatpush2.msra.mxu0 %v1297
  %1513 = vmatprep.subr.mxu0 0.0
  %1514 = vmatpush2.msra.mxu0 %v1296
  %1515 = vmatprep.subr.mxu0 0.0
  %1516 = vmatpush2.msra.mxu0 %v1295
  %1517 = vmatprep.subr.mxu0 0.0
  %1518 = vmatpush2.msra.mxu0 %v1294
  %1519 = vmatprep.subr.mxu0 0.0
  %1520 = vmatpush2.msra.mxu0 %v1293
  %1521 = vmatprep.subr.mxu0 0.0
  %1522 = vmatpush2.msra.mxu0 %v1292
  %1523 = vmatprep.subr.mxu0 0.0
  %1524 = vmatpush2.msra.mxu0 %v1291
  %1525 = vmatprep.subr.mxu0 0.0
  %1526 = vmatpush2.msra.mxu0 %v1290
  %1527 = vmatprep.subr.mxu0 0.0
  %1528 = vmatpush2.msra.mxu0 %v1289
  %1529 = vmatprep.subr.mxu0 0.0
  %1530 = vmatpush2.msra.mxu0 %v1288
  %1531 = vmatprep.subr.mxu0 0.0
  %1532 = vmatpush2.msra.mxu0 %v1287
  %1533 = vmatprep.subr.mxu0 0.0
  %1534 = vmatpush2.msra.mxu0 %v1286
  %1535 = vmatprep.subr.mxu0 0.0
  %1536 = vmatpush2.msra.mxu0 %v1285
  %1537 = vmatprep.subr.mxu0 0.0
  %1538 = vmatpush2.msra.mxu0 %v1284
  %1539 = vmatprep.subr.mxu0 0.0
  %1540 = vmatpush2.msra.mxu0 %v1283
  %1541 = vmatprep.subr.mxu0 0.0
  %1542 = vmatpush2.msra.mxu0 %v1282
  %1543 = vmatprep.mubr.f32.mxu0 %v1197
  %1544 = vmatmul.mubr.f32.gmra.mxu0 %v1196
  %v1545 = vpop.f32.mrf.mxu0
  %v1546 = vadd.f32 %v1461, %v1545
  %v1547 = vpop.f32.mrf.mxu0
  %1548 = vmatprep.mubr.f32.mxu0 %v1207
  %1549 = vmatmul.mubr.f32.gmra.mxu0 %v1206
  %v1550 = vpop.f32.mrf.mxu0
  %v1551 = vadd.f32 %v1466, %v1550
  %v1552 = vpop.f32.mrf.mxu0
  %1553 = vmatprep.mubr.f32.mxu0 %v1217
  %1554 = vmatmul.mubr.f32.gmra.mxu0 %v1216
  %v1555 = vpop.f32.mrf.mxu0
  %v1556 = vadd.f32 %v1471, %v1555
  %v1557 = vpop.f32.mrf.mxu0
  %1558 = vmatprep.mubr.f32.mxu0 %v1227
  %1559 = vmatmul.mubr.f32.gmra.mxu0 %v1226
  %v1560 = vpop.f32.mrf.mxu0
  %v1561 = vadd.f32 %v1476, %v1560
  %v1562 = vpop.f32.mrf.mxu0
  %1563 = vdwg.mxu0
  %1564 = vmatprep.subr.mxu0 0.0
  %1565 = vmatpush1.msra.mxu0 %v1313
  %1566 = vmatprep.subr.mxu0 0.0
  %1567 = vmatpush1.msra.mxu0 %v1312
  %1568 = vmatprep.subr.mxu0 0.0
  %1569 = vmatpush1.msra.mxu0 %v1311
  %1570 = vmatprep.subr.mxu0 0.0
  %1571 = vmatpush1.msra.mxu0 %v1310
  %1572 = vmatprep.subr.mxu0 0.0
  %1573 = vmatpush1.msra.mxu0 %v1309
  %1574 = vmatprep.subr.mxu0 0.0
  %1575 = vmatpush1.msra.mxu0 %v1308
  %1576 = vmatprep.subr.mxu0 0.0
  %1577 = vmatpush1.msra.mxu0 %v1307
  %1578 = vmatprep.subr.mxu0 0.0
  %1579 = vmatpush1.msra.mxu0 %v1306
  %1580 = vmatprep.subr.mxu0 0.0
  %1581 = vmatpush1.msra.mxu0 %v1305
  %1582 = vmatprep.subr.mxu0 0.0
  %1583 = vmatpush1.msra.mxu0 %v1304
  %1584 = vmatprep.subr.mxu0 0.0
  %1585 = vmatpush1.msra.mxu0 %v1303
  %1586 = vmatprep.subr.mxu0 0.0
  %1587 = vmatpush1.msra.mxu0 %v1302
  %1588 = vmatprep.subr.mxu0 0.0
  %1589 = vmatpush1.msra.mxu0 %v1301
  %1590 = vmatprep.subr.mxu0 0.0
  %1591 = vmatpush1.msra.mxu0 %v1300
  %1592 = vmatprep.subr.mxu0 0.0
  %1593 = vmatpush1.msra.mxu0 %v1299
  %1594 = vmatprep.subr.mxu0 0.0
  %1595 = vmatpush1.msra.mxu0 %v1298
  %1596 = vmatprep.subr.mxu0 0.0
  %1597 = vmatpush2.msra.mxu0 %v1329
  %1598 = vmatprep.subr.mxu0 0.0
  %1599 = vmatpush2.msra.mxu0 %v1328
  %1600 = vmatprep.subr.mxu0 0.0
  %1601 = vmatpush2.msra.mxu0 %v1327
  %1602 = vmatprep.subr.mxu0 0.0
  %1603 = vmatpush2.msra.mxu0 %v1326
  %1604 = vmatprep.subr.mxu0 0.0
  %1605 = vmatpush2.msra.mxu0 %v1325
  %1606 = vmatprep.subr.mxu0 0.0
  %1607 = vmatpush2.msra.mxu0 %v1324
  %1608 = vmatprep.subr.mxu0 0.0
  %1609 = vmatpush2.msra.mxu0 %v1323
  %1610 = vmatprep.subr.mxu0 0.0
  %1611 = vmatpush2.msra.mxu0 %v1322
  %1612 = vmatprep.subr.mxu0 0.0
  %1613 = vmatpush2.msra.mxu0 %v1321
  %1614 = vmatprep.subr.mxu0 0.0
  %1615 = vmatpush2.msra.mxu0 %v1320
  %1616 = vmatprep.subr.mxu0 0.0
  %1617 = vmatpush2.msra.mxu0 %v1319
  %1618 = vmatprep.subr.mxu0 0.0
  %1619 = vmatpush2.msra.mxu0 %v1318
  %1620 = vmatprep.subr.mxu0 0.0
  %1621 = vmatpush2.msra.mxu0 %v1317
  %1622 = vmatprep.subr.mxu0 0.0
  %1623 = vmatpush2.msra.mxu0 %v1316
  %1624 = vmatprep.subr.mxu0 0.0
  %1625 = vmatpush2.msra.mxu0 %v1315
  %1626 = vmatprep.subr.mxu0 0.0
  %1627 = vmatpush2.msra.mxu0 %v1314
  %1628 = vmatprep.mubr.f32.mxu0 %v1199
  %1629 = vmatmul.mubr.f32.gmra.mxu0 %v1198
  %v1630 = vpop.f32.mrf.mxu0
  %v1631 = vadd.f32 %v1546, %v1630
  %v1632 = vpop.f32.mrf.mxu0
  %1633 = vmatprep.mubr.f32.mxu0 %v1209
  %1634 = vmatmul.mubr.f32.gmra.mxu0 %v1208
  %v1635 = vpop.f32.mrf.mxu0
  %v1636 = vadd.f32 %v1551, %v1635
  %v1637 = vpop.f32.mrf.mxu0
  %1638 = vmatprep.mubr.f32.mxu0 %v1219
  %1639 = vmatmul.mubr.f32.gmra.mxu0 %v1218
  %v1640 = vpop.f32.mrf.mxu0
  %v1641 = vadd.f32 %v1556, %v1640
  %v1642 = vpop.f32.mrf.mxu0
  %1643 = vmatprep.mubr.f32.mxu0 %v1229
  %1644 = vmatmul.mubr.f32.gmra.mxu0 %v1228
  %v1645 = vpop.f32.mrf.mxu0
  %v1646 = vadd.f32 %v1561, %v1645
  %v1647 = vpop.f32.mrf.mxu0
  %1648 = vdwg.mxu0
  %1649 = vmatprep.subr.mxu0 0.0
  %1650 = vmatpush1.msra.mxu0 %v1345
  %1651 = vmatprep.subr.mxu0 0.0
  %1652 = vmatpush1.msra.mxu0 %v1344
  %1653 = vmatprep.subr.mxu0 0.0
  %1654 = vmatpush1.msra.mxu0 %v1343
  %1655 = vmatprep.subr.mxu0 0.0
  %1656 = vmatpush1.msra.mxu0 %v1342
  %1657 = vmatprep.subr.mxu0 0.0
  %1658 = vmatpush1.msra.mxu0 %v1341
  %1659 = vmatprep.subr.mxu0 0.0
  %1660 = vmatpush1.msra.mxu0 %v1340
  %1661 = vmatprep.subr.mxu0 0.0
  %1662 = vmatpush1.msra.mxu0 %v1339
  %1663 = vmatprep.subr.mxu0 0.0
  %1664 = vmatpush1.msra.mxu0 %v1338
  %1665 = vmatprep.subr.mxu0 0.0
  %1666 = vmatpush1.msra.mxu0 %v1337
  %1667 = vmatprep.subr.mxu0 0.0
  %1668 = vmatpush1.msra.mxu0 %v1336
  %1669 = vmatprep.subr.mxu0 0.0
  %1670 = vmatpush1.msra.mxu0 %v1335
  %1671 = vmatprep.subr.mxu0 0.0
  %1672 = vmatpush1.msra.mxu0 %v1334
  %1673 = vmatprep.subr.mxu0 0.0
  %1674 = vmatpush1.msra.mxu0 %v1333
  %1675 = vmatprep.subr.mxu0 0.0
  %1676 = vmatpush1.msra.mxu0 %v1332
  %1677 = vmatprep.subr.mxu0 0.0
  %1678 = vmatpush1.msra.mxu0 %v1331
  %1679 = vmatprep.subr.mxu0 0.0
  %1680 = vmatpush1.msra.mxu0 %v1330
  %1681 = vmatprep.subr.mxu0 0.0
  %1682 = vmatpush2.msra.mxu0 %v1361
  %1683 = vmatprep.subr.mxu0 0.0
  %1684 = vmatpush2.msra.mxu0 %v1360
  %1685 = vmatprep.subr.mxu0 0.0
  %1686 = vmatpush2.msra.mxu0 %v1359
  %1687 = vmatprep.subr.mxu0 0.0
  %1688 = vmatpush2.msra.mxu0 %v1358
  %1689 = vmatprep.subr.mxu0 0.0
  %1690 = vmatpush2.msra.mxu0 %v1357
  %1691 = vmatprep.subr.mxu0 0.0
  %1692 = vmatpush2.msra.mxu0 %v1356
  %1693 = vmatprep.subr.mxu0 0.0
  %1694 = vmatpush2.msra.mxu0 %v1355
  %1695 = vmatprep.subr.mxu0 0.0
  %1696 = vmatpush2.msra.mxu0 %v1354
  %1697 = vmatprep.subr.mxu0 0.0
  %1698 = vmatpush2.msra.mxu0 %v1353
  %1699 = vmatprep.subr.mxu0 0.0
  %1700 = vmatpush2.msra.mxu0 %v1352
  %1701 = vmatprep.subr.mxu0 0.0
  %1702 = vmatpush2.msra.mxu0 %v1351
  %1703 = vmatprep.subr.mxu0 0.0
  %1704 = vmatpush2.msra.mxu0 %v1350
  %1705 = vmatprep.subr.mxu0 0.0
  %1706 = vmatpush2.msra.mxu0 %v1349
  %1707 = vmatprep.subr.mxu0 0.0
  %1708 = vmatpush2.msra.mxu0 %v1348
  %1709 = vmatprep.subr.mxu0 0.0
  %1710 = vmatpush2.msra.mxu0 %v1347
  %1711 = vmatprep.subr.mxu0 0.0
  %1712 = vmatpush2.msra.mxu0 %v1346
  %1713 = vmatprep.mubr.f32.mxu0 %v1201
  %1714 = vmatmul.mubr.f32.gmra.mxu0 %v1200
  %v1715 = vpop.f32.mrf.mxu0
  %v1716 = vadd.f32 %v1631, %v1715
  %v1717 = vpop.f32.mrf.mxu0
  %1718 = vmatprep.mubr.f32.mxu0 %v1211
  %1719 = vmatmul.mubr.f32.gmra.mxu0 %v1210
  %v1720 = vpop.f32.mrf.mxu0
  %v1721 = vadd.f32 %v1636, %v1720
  %v1722 = vpop.f32.mrf.mxu0
  %1723 = vmatprep.mubr.f32.mxu0 %v1221
  %1724 = vmatmul.mubr.f32.gmra.mxu0 %v1220
  %v1725 = vpop.f32.mrf.mxu0
  %v1726 = vadd.f32 %v1641, %v1725
  %v1727 = vpop.f32.mrf.mxu0
  %1728 = vmatprep.mubr.f32.mxu0 %v1231
  %1729 = vmatmul.mubr.f32.gmra.mxu0 %v1230
  %v1730 = vpop.f32.mrf.mxu0
  %v1731 = vadd.f32 %v1646, %v1730
  %v1732 = vpop.f32.mrf.mxu0
  %1733 = vdwg.mxu0
  %1734 = vmatprep.subr.mxu0 0.0
  %1735 = vmatpush1.msra.mxu0 %v1377
  %1736 = vmatprep.subr.mxu0 0.0
  %1737 = vmatpush1.msra.mxu0 %v1376
  %1738 = vmatprep.subr.mxu0 0.0
  %1739 = vmatpush1.msra.mxu0 %v1375
  %1740 = vmatprep.subr.mxu0 0.0
  %1741 = vmatpush1.msra.mxu0 %v1374
  %1742 = vmatprep.subr.mxu0 0.0
  %1743 = vmatpush1.msra.mxu0 %v1373
  %1744 = vmatprep.subr.mxu0 0.0
  %1745 = vmatpush1.msra.mxu0 %v1372
  %1746 = vmatprep.subr.mxu0 0.0
  %1747 = vmatpush1.msra.mxu0 %v1371
  %1748 = vmatprep.subr.mxu0 0.0
  %1749 = vmatpush1.msra.mxu0 %v1370
  %1750 = vmatprep.subr.mxu0 0.0
  %1751 = vmatpush1.msra.mxu0 %v1369
  %1752 = vmatprep.subr.mxu0 0.0
  %1753 = vmatpush1.msra.mxu0 %v1368
  %1754 = vmatprep.subr.mxu0 0.0
  %1755 = vmatpush1.msra.mxu0 %v1367
  %1756 = vmatprep.subr.mxu0 0.0
  %1757 = vmatpush1.msra.mxu0 %v1366
  %1758 = vmatprep.subr.mxu0 0.0
  %1759 = vmatpush1.msra.mxu0 %v1365
  %1760 = vmatprep.subr.mxu0 0.0
  %1761 = vmatpush1.msra.mxu0 %v1364
  %1762 = vmatprep.subr.mxu0 0.0
  %1763 = vmatpush1.msra.mxu0 %v1363
  %1764 = vmatprep.subr.mxu0 0.0
  %1765 = vmatpush1.msra.mxu0 %v1362
  %1766 = vmatprep.subr.mxu0 0.0
  %1767 = vmatpush2.msra.mxu0 %v1393
  %1768 = vmatprep.subr.mxu0 0.0
  %1769 = vmatpush2.msra.mxu0 %v1392
  %1770 = vmatprep.subr.mxu0 0.0
  %1771 = vmatpush2.msra.mxu0 %v1391
  %1772 = vmatprep.subr.mxu0 0.0
  %1773 = vmatpush2.msra.mxu0 %v1390
  %1774 = vmatprep.subr.mxu0 0.0
  %1775 = vmatpush2.msra.mxu0 %v1389
  %1776 = vmatprep.subr.mxu0 0.0
  %1777 = vmatpush2.msra.mxu0 %v1388
  %1778 = vmatprep.subr.mxu0 0.0
  %1779 = vmatpush2.msra.mxu0 %v1387
  %1780 = vmatprep.subr.mxu0 0.0
  %1781 = vmatpush2.msra.mxu0 %v1386
  %1782 = vmatprep.subr.mxu0 0.0
  %1783 = vmatpush2.msra.mxu0 %v1385
  %1784 = vmatprep.subr.mxu0 0.0
  %1785 = vmatpush2.msra.mxu0 %v1384
  %1786 = vmatprep.subr.mxu0 0.0
  %1787 = vmatpush2.msra.mxu0 %v1383
  %1788 = vmatprep.subr.mxu0 0.0
  %1789 = vmatpush2.msra.mxu0 %v1382
  %1790 = vmatprep.subr.mxu0 0.0
  %1791 = vmatpush2.msra.mxu0 %v1381
  %1792 = vmatprep.subr.mxu0 0.0
  %1793 = vmatpush2.msra.mxu0 %v1380
  %1794 = vmatprep.subr.mxu0 0.0
  %1795 = vmatpush2.msra.mxu0 %v1379
  %1796 = vmatprep.subr.mxu0 0.0
  %1797 = vmatpush2.msra.mxu0 %v1378
  %1798 = vmatprep.mubr.f32.mxu0 %v1203
  %1799 = vmatmul.mubr.f32.gmra.mxu0 %v1202
  %v1800 = vpop.f32.mrf.mxu0
  %v1801 = vadd.f32 %v1716, %v1800
  %v1802 = vpop.f32.mrf.mxu0
  %1803 = vmatprep.mubr.f32.mxu0 %v1213
  %1804 = vmatmul.mubr.f32.gmra.mxu0 %v1212
  %v1805 = vpop.f32.mrf.mxu0
  %v1806 = vadd.f32 %v1721, %v1805
  %v1807 = vpop.f32.mrf.mxu0
  %1808 = vmatprep.mubr.f32.mxu0 %v1223
  %1809 = vmatmul.mubr.f32.gmra.mxu0 %v1222
  %v1810 = vpop.f32.mrf.mxu0
  %v1811 = vadd.f32 %v1726, %v1810
  %v1812 = vpop.f32.mrf.mxu0
  %1813 = vmatprep.mubr.f32.mxu0 %v1233
  %1814 = vmatmul.mubr.f32.gmra.mxu0 %v1232
  %v1815 = vpop.f32.mrf.mxu0
  %v1816 = vadd.f32 %v1731, %v1815
  %v1817 = vpop.f32.mrf.mxu0
  %1818 = vdwg.mxu0
  %v1819 = vld [vmem:[%s4] sm:$0xff]
  %v1820 = vld [vmem:[%s4 + $0x8] sm:$0xff]
  %v1821 = vld [vmem:[%s4 + $0x10] sm:$0xff]
  %v1822 = vld [vmem:[%s4 + $0x18] sm:$0xff]
  %v1823 = vld [vmem:[%s5] sm:$0xff]
  %v1824 = vld [vmem:[%s5 + $0x8] sm:$0xff]
  %v1825 = vld [vmem:[%s5 + $0x10] sm:$0xff]
  %v1826 = vld [vmem:[%s5 + $0x18] sm:$0xff]
  %1828 = vset.pattern.permute.xlu0 0
  %1829 = vperm.xlu0 %1828, %v1823
  %v1830 = vpop.permute.xlu0 %1829
  %1833 = vset.pattern.permute.xlu0 0
  %1834 = vperm.xlu0 %1833, %v1824
  %v1835 = vpop.permute.xlu0 %1834
  %1838 = vset.pattern.permute.xlu0 0
  %1839 = vperm.xlu0 %1838, %v1825
  %v1840 = vpop.permute.xlu0 %1839
  %1843 = vset.pattern.permute.xlu0 0
  %1844 = vperm.xlu0 %1843, %v1826
  %v1845 = vpop.permute.xlu0 %1844
  %vm1847 = vcmask 261120
  %v1849 = vsel %vm1847, %v1819, 0
  %v1852 = vsel %vm1847, %v1820, 0
  %v1855 = vsel %vm1847, %v1821, 0
  %v1858 = vsel %vm1847, %v1822, 0
  %1860 = vmatprep.subr.mxu0 0.0
  %1861 = vmatpush1.msra.mxu0 0.0
  %1862 = vmatprep.subr.mxu0 0.0
  %1863 = vmatpush1.msra.mxu0 0.0
  %1864 = vmatprep.subr.mxu0 0.0
  %1865 = vmatpush1.msra.mxu0 0.0
  %1866 = vmatprep.subr.mxu0 0.0
  %1867 = vmatpush1.msra.mxu0 0.0
  %1868 = vmatprep.subr.mxu0 0.0
  %1869 = vmatpush1.msra.mxu0 0.0
  %1870 = vmatprep.subr.mxu0 0.0
  %1871 = vmatpush1.msra.mxu0 0.0
  %1872 = vmatprep.subr.mxu0 0.0
  %1873 = vmatpush1.msra.mxu0 0.0
  %1874 = vmatprep.subr.mxu0 0.0
  %1875 = vmatpush1.msra.mxu0 0.0
  %1876 = vmatprep.subr.mxu0 0.0
  %1877 = vmatpush1.msra.mxu0 0.0
  %1878 = vmatprep.subr.mxu0 0.0
  %1879 = vmatpush1.msra.mxu0 0.0
  %1880 = vmatprep.subr.mxu0 0.0
  %1881 = vmatpush1.msra.mxu0 0.0
  %1882 = vmatprep.subr.mxu0 0.0
  %1883 = vmatpush1.msra.mxu0 0.0
  %1884 = vmatprep.subr.mxu0 0.0
  %1885 = vmatpush1.msra.mxu0 %v1816
  %1886 = vmatprep.subr.mxu0 0.0
  %1887 = vmatpush1.msra.mxu0 %v1811
  %1888 = vmatprep.subr.mxu0 0.0
  %1889 = vmatpush1.msra.mxu0 %v1806
  %1890 = vmatprep.subr.mxu0 0.0
  %1891 = vmatpush1.msra.mxu0 %v1801
  %1892 = vmatprep.subr.mxu0 0.0
  %1893 = vmatpush2.msra.mxu0 0.0
  %1894 = vmatprep.subr.mxu0 0.0
  %1895 = vmatpush2.msra.mxu0 0.0
  %1896 = vmatprep.subr.mxu0 0.0
  %1897 = vmatpush2.msra.mxu0 0.0
  %1898 = vmatprep.subr.mxu0 0.0
  %1899 = vmatpush2.msra.mxu0 0.0
  %1900 = vmatprep.subr.mxu0 0.0
  %1901 = vmatpush2.msra.mxu0 0.0
  %1902 = vmatprep.subr.mxu0 0.0
  %1903 = vmatpush2.msra.mxu0 0.0
  %1904 = vmatprep.subr.mxu0 0.0
  %1905 = vmatpush2.msra.mxu0 0.0
  %1906 = vmatprep.subr.mxu0 0.0
  %1907 = vmatpush2.msra.mxu0 0.0
  %1908 = vmatprep.subr.mxu0 0.0
  %1909 = vmatpush2.msra.mxu0 0.0
  %1910 = vmatprep.subr.mxu0 0.0
  %1911 = vmatpush2.msra.mxu0 0.0
  %1912 = vmatprep.subr.mxu0 0.0
  %1913 = vmatpush2.msra.mxu0 0.0
  %1914 = vmatprep.subr.mxu0 0.0
  %1915 = vmatpush2.msra.mxu0 0.0
  %1916 = vmatprep.subr.mxu0 0.0
  %1917 = vmatpush2.msra.mxu0 0.0
  %1918 = vmatprep.subr.mxu0 0.0
  %1919 = vmatpush2.msra.mxu0 0.0
  %1920 = vmatprep.subr.mxu0 0.0
  %1921 = vmatpush2.msra.mxu0 0.0
  %1922 = vmatprep.subr.mxu0 0.0
  %1923 = vmatpush2.msra.mxu0 0.0
  %1924 = vmatprep.mubr.f32.mxu0 0.0
  %1925 = vmatmul.mubr.f32.gmra.mxu0 %v1849
  %v1926 = vpop.f32.mrf.mxu0
  %v1927 = vadd.f32 %v1830, %v1926
  %v1928 = vpop.f32.mrf.mxu0
  %1929 = vmatprep.mubr.f32.mxu0 0.0
  %1930 = vmatmul.mubr.f32.gmra.mxu0 %v1852
  %v1931 = vpop.f32.mrf.mxu0
  %v1932 = vadd.f32 %v1835, %v1931
  %v1933 = vpop.f32.mrf.mxu0
  %1934 = vmatprep.mubr.f32.mxu0 0.0
  %1935 = vmatmul.mubr.f32.gmra.mxu0 %v1855
  %v1936 = vpop.f32.mrf.mxu0
  %v1937 = vadd.f32 %v1840, %v1936
  %v1938 = vpop.f32.mrf.mxu0
  %1939 = vmatprep.mubr.f32.mxu0 0.0
  %1940 = vmatmul.mubr.f32.gmra.mxu0 %v1858
  %v1941 = vpop.f32.mrf.mxu0
  %v1942 = vadd.f32 %v1845, %v1941
  %v1943 = vpop.f32.mrf.mxu0
  %1944 = vdwg.mxu0
  %v1945 = vmax.f32 %v1927, 0.0
  %v1946 = vmax.f32 %v1932, 0.0
  %v1947 = vmax.f32 %v1937, 0.0
  %v1948 = vmax.f32 %v1942, 0.0
  %v1949 = vld [vmem:[%s6] sm:$0xff]
  %v1950 = vld [vmem:[%s6 + $0x8] sm:$0xff]
  %v1951 = vld [vmem:[%s6 + $0x10] sm:$0xff]
  %v1952 = vld [vmem:[%s6 + $0x18] sm:$0xff]
  %1954 = vset.pattern.permute.xlu0 0
  %1955 = vperm.xlu0 %1954, %v1949
  %v1956 = vpop.permute.xlu0 %1955
  %1959 = vset.pattern.permute.xlu0 0
  %1960 = vperm.xlu0 %1959, %v1950
  %v1961 = vpop.permute.xlu0 %1960
  %1964 = vset.pattern.permute.xlu0 0
  %1965 = vperm.xlu0 %1964, %v1951
  %v1966 = vpop.permute.xlu0 %1965
  %1969 = vset.pattern.permute.xlu0 0
  %1970 = vperm.xlu0 %1969, %v1952
  %v1971 = vpop.permute.xlu0 %1970
  %v1973 = vmul.f32 %v1945, %v1956
  %v1974 = vmul.f32 %v1946, %v1961
  %v1975 = vmul.f32 %v1947, %v1966
  %v1976 = vmul.f32 %v1948, %v1971
  %v1977 = vld [vmem:[%s7] sm:$0xff]
  %v1978 = vld [vmem:[%s7 + $0x8] sm:$0xff]
  %v1979 = vld [vmem:[%s7 + $0x10] sm:$0xff]
  %v1980 = vld [vmem:[%s7 + $0x18] sm:$0xff]
  %1982 = vset.pattern.permute.xlu0 0
  %1983 = vperm.xlu0 %1982, %v1977
  %v1984 = vpop.permute.xlu0 %1983
  %1987 = vset.pattern.permute.xlu0 0
  %1988 = vperm.xlu0 %1987, %v1978
  %v1989 = vpop.permute.xlu0 %1988
  %1992 = vset.pattern.permute.xlu0 0
  %1993 = vperm.xlu0 %1992, %v1979
  %v1994 = vpop.permute.xlu0 %1993
  %1997 = vset.pattern.permute.xlu0 0
  %1998 = vperm.xlu0 %1997, %v1980
  %v1999 = vpop.permute.xlu0 %1998
  %v2001 = vadd.f32 %v1973, %v1984
  %v2002 = vadd.f32 %v1974, %v1989
  %v2003 = vadd.f32 %v1975, %v1994
  %v2004 = vadd.f32 %v1976, %v1999
  %v2005 = vld [vmem:[%s8] sm:$0xff]
  %v2006 = vld [vmem:[%s8 + $0x8] sm:$0xf]
  %v2007 = vld [vmem:[%s9] sm:$0xff]
  %v2008 = vld [vmem:[%s9 + $0x8] sm:$0xf]
  %2010 = vset.pattern.permute.xlu0 0
  %2011 = vperm.xlu0 %2010, %v2007
  %v2012 = vpop.permute.xlu0 %2011
  %2015 = vset.pattern.permute.xlu0 0
  %2016 = vperm.xlu0 %2015, %v2008
  %v2017 = vpop.permute.xlu0 %2016
  %v2020 = vsel %vm1847, %v2005, 0
  %v2023 = vsel %vm1847, %v2006, 0
  %2025 = vmatprep.subr.mxu0 0.0
  %2026 = vmatpush1.msra.mxu0 0.0
  %2027 = vmatprep.subr.mxu0 0.0
  %2028 = vmatpush1.msra.mxu0 0.0
  %2029 = vmatprep.subr.mxu0 0.0
  %2030 = vmatpush1.msra.mxu0 0.0
  %2031 = vmatprep.subr.mxu0 0.0
  %2032 = vmatpush1.msra.mxu0 0.0
  %2033 = vmatprep.subr.mxu0 0.0
  %2034 = vmatpush1.msra.mxu0 0.0
  %2035 = vmatprep.subr.mxu0 0.0
  %2036 = vmatpush1.msra.mxu0 0.0
  %2037 = vmatprep.subr.mxu0 0.0
  %2038 = vmatpush1.msra.mxu0 0.0
  %2039 = vmatprep.subr.mxu0 0.0
  %2040 = vmatpush1.msra.mxu0 0.0
  %2041 = vmatprep.subr.mxu0 0.0
  %2042 = vmatpush1.msra.mxu0 0.0
  %2043 = vmatprep.subr.mxu0 0.0
  %2044 = vmatpush1.msra.mxu0 0.0
  %2045 = vmatprep.subr.mxu0 0.0
  %2046 = vmatpush1.msra.mxu0 0.0
  %2047 = vmatprep.subr.mxu0 0.0
  %2048 = vmatpush1.msra.mxu0 0.0
  %2049 = vmatprep.subr.mxu0 0.0
  %2050 = vmatpush1.msra.mxu0 %v2004
  %2051 = vmatprep.subr.mxu0 0.0
  %2052 = vmatpush1.msra.mxu0 %v2003
  %2053 = vmatprep.subr.mxu0 0.0
  %2054 = vmatpush1.msra.mxu0 %v2002
  %2055 = vmatprep.subr.mxu0 0.0
  %2056 = vmatpush1.msra.mxu0 %v2001
  %2057 = vmatprep.subr.mxu0 0.0
  %2058 = vmatpush2.msra.mxu0 0.0
  %2059 = vmatprep.subr.mxu0 0.0
  %2060 = vmatpush2.msra.mxu0 0.0
  %2061 = vmatprep.subr.mxu0 0.0
  %2062 = vmatpush2.msra.mxu0 0.0
  %2063 = vmatprep.subr.mxu0 0.0
  %2064 = vmatpush2.msra.mxu0 0.0
  %2065 = vmatprep.subr.mxu0 0.0
  %2066 = vmatpush2.msra.mxu0 0.0
  %2067 = vmatprep.subr.mxu0 0.0
  %2068 = vmatpush2.msra.mxu0 0.0
  %2069 = vmatprep.subr.mxu0 0.0
  %2070 = vmatpush2.msra.mxu0 0.0
  %2071 = vmatprep.subr.mxu0 0.0
  %2072 = vmatpush2.msra.mxu0 0.0
  %2073 = vmatprep.subr.mxu0 0.0
  %2074 = vmatpush2.msra.mxu0 0.0
  %2075 = vmatprep.subr.mxu0 0.0
  %2076 = vmatpush2.msra.mxu0 0.0
  %2077 = vmatprep.subr.mxu0 0.0
  %2078 = vmatpush2.msra.mxu0 0.0
  %2079 = vmatprep.subr.mxu0 0.0
  %2080 = vmatpush2.msra.mxu0 0.0
  %2081 = vmatprep.subr.mxu0 0.0
  %2082 = vmatpush2.msra.mxu0 0.0
  %2083 = vmatprep.subr.mxu0 0.0
  %2084 = vmatpush2.msra.mxu0 0.0
  %2085 = vmatprep.subr.mxu0 0.0
  %2086 = vmatpush2.msra.mxu0 0.0
  %2087 = vmatprep.subr.mxu0 0.0
  %2088 = vmatpush2.msra.mxu0 0.0
  %2089 = vmatprep.mubr.f32.mxu0 0.0
  %2090 = vmatmul.mubr.f32.gmra.mxu0 %v2020
  %v2091 = vpop.f32.mrf.mxu0
  %v2092 = vadd.f32 %v2012, %v2091
  %v2093 = vpop.f32.mrf.mxu0
  %2094 = vmatprep.mubr.f32.mxu0 0.0
  %2095 = vmatmul.mubr.f32.gmra.mxu0 %v2023
  %v2096 = vpop.f32.mrf.mxu0
  %v2097 = vadd.f32 %v2017, %v2096
  %v2098 = vpop.f32.mrf.mxu0
  %2099 = vdwg.mxu0
  %2100 = vst [vmem:[%s10] sm:$0xff] %v2092
  %2101 = vst [vmem:[%s10 + $0x8] sm:$0xf] %v2097
  // Predicated region
  $region42: #{conv_tail_pool_forward.1} parent=0 // pred_check
    _
  $region43: #{conv_tail_pool_forward.1} parent=0 // pred_check_branch
    %2103 = sbr.rel (0) target = $region45
  $region44: #{conv_tail_pool_forward.1} parent=0 // pred_region
    _
  $region45: #{conv_tail_pool_forward.1} parent=0 // pred_fallthru
    _
  // Predicated region
  $region46: #{conv_tail_pool_forward.1} parent=0 // pred_check
    _
  $region47: #{conv_tail_pool_forward.1} parent=0 // pred_check_branch
    %2105 = sbr.rel (0) target = $region49
  $region48: #{conv_tail_pool_forward.1} parent=0 // pred_region
    _
  $region49: #{conv_tail_pool_forward.1} parent=0 // pred_fallthru
    _

</llo_original>
